<compile_context>
chip_gen: v5e
topology: v5e:2x2
jax: 0.10.0
libtpu: 0.0.40
codegen_flags: <defaults>
</compile_context>

<pallas_src>
import functools
import math

import jax
import jax.numpy as jnp
from jax import lax
from jax.experimental import pallas as pl
from jax.experimental.pallas import tpu as pltpu

# Group-statistic matmuls are tiny (C x C @ C x 1); keep them exact.
_GN_PRECISION = lax.Precision.HIGHEST


def _silu(v):
    return v * jax.nn.sigmoid(v)


def _group_norm(h, gamma, beta, mean_mat, eps=1e-5):
    """PyTorch GroupNorm on a per-sample (C, S) tile, vectorized over groups.

    mean_mat[c, c'] = 1/(group_size * S) if c, c' are in the same group else 0,
    so `mean_mat @ row_sums` yields the per-channel (group-shared) mean.
    Two-pass variance (no E[x^2]-E[x]^2 cancellation).
    """
    row_sum = jnp.sum(h, axis=1, keepdims=True)                      # (C, 1)
    mu = jnp.dot(mean_mat, row_sum, preferred_element_type=jnp.float32,
                 precision=_GN_PRECISION)                            # (C, 1)
    centered = h - mu
    row_ss = jnp.sum(centered * centered, axis=1, keepdims=True)     # (C, 1)
    var = jnp.dot(mean_mat, row_ss, preferred_element_type=jnp.float32,
                  precision=_GN_PRECISION)                           # (C, 1)
    return centered * lax.rsqrt(var + eps) * gamma + beta


def _col_variants(h, masks, KW, W):
    """KW column-shifted (circular within each W-row) copies of a (C, S) tile."""
    out = []
    for dx in range(KW):
        sx = dx - KW // 2
        if sx == 0:
            v = h
        elif sx > 0:
            v = jnp.where(masks[sx], jnp.roll(h, W - sx, axis=1),
                          jnp.roll(h, -sx, axis=1))
        else:
            v = jnp.where(masks[sx], jnp.roll(h, -(W + sx), axis=1),
                          jnp.roll(h, -sx, axis=1))
        out.append(v)
    return out


def _fill_col_stack(taps_ref, h, masks, *, C, C_pad, KW, W, S, cdtype):
    """Write the KW column-shifted variants of h into the shared tap stack.

    Slab j occupies rows [j*C_pad, (j+1)*C_pad); pad rows are zeroed so the
    (zero) weight columns never multiply stale VMEM garbage.
    """
    vs = _col_variants(h, masks, KW, W)
    for j, v in enumerate(vs):
        base = j * C_pad
        taps_ref[base:base + C, :] = v.astype(cdtype)
        if C_pad > C:
            taps_ref[base + C:base + C_pad, :] = jnp.zeros((C_pad - C, S), cdtype)


def _conv_from_stack(taps_ref, w_ref, bias, *, n_rows, KH, W, mm_precision):
    """'Same' circular conv from the column-shift stack: KH matmuls whose
    partial results are lane-rolled by -sy*W (circular row shift) and summed."""
    stack = taps_ref[0:n_rows, :]
    acc = None
    for dy in range(KH):
        part = jnp.dot(w_ref[dy], stack, preferred_element_type=jnp.float32,
                       precision=mm_precision)
        sy = dy - KH // 2
        if sy != 0:
            part = jnp.roll(part, -sy * W, axis=1)       # XLU lane roll
        acc = part if acc is None else acc + part
    return acc + bias


def _conv_block_kernel(x_ref, film_ref,
                       a1_ref, g1_ref, b1_ref, w1_ref, cb1_ref,
                       a2_ref, g2_ref, b2_ref, w2_ref, cb2sb_ref,
                       o_ref, taps_ref,
                       *, H, W, KH, KW, C_in, C_out, Cin_pad, Cout_pad,
                       cdtype, mm_precision):
    S = H * W

    # Hoisted column index + wrap masks (shared by both convs).
    col = lax.broadcasted_iota(jnp.int32, (1, S), 1)
    if W & (W - 1) == 0:
        col = jnp.bitwise_and(col, W - 1)
    else:
        col = lax.rem(col, W)
    masks = {}
    for dx in range(KW):
        sx = dx - KW // 2
        if sx > 0:
            masks[sx] = col >= (W - sx)
        elif sx < 0:
            masks[sx] = col < (-sx)

    x = x_ref[...]                                                   # (C_in, S)

    # --- main path ---
    h = _group_norm(x, g1_ref[...], b1_ref[...], a1_ref[...])        # GroupNorm1
    h = _silu(h)                                                     # Swish
    _fill_col_stack(taps_ref, h, masks, C=C_in, C_pad=Cin_pad,
                    KW=KW, W=W, S=S, cdtype=cdtype)
    h = _conv_from_stack(taps_ref, w1_ref, cb1_ref[...],
                         n_rows=KW * Cin_pad, KH=KH, W=W,
                         mm_precision=mm_precision)                  # Conv1

    h = _group_norm(h, g2_ref[...], b2_ref[...], a2_ref[...])        # GroupNorm2
    film = film_ref[...]                                             # (2*C_out, 1)
    h = h * film[0:C_out, :] + film[C_out:2 * C_out, :]              # FiLM
    h = _silu(h)                                                     # Swish
    # dropout(p=0.0) -> identity (eval semantics)

    # Conv2 with the 1x1 skip projection fused: x is appended as extra
    # contraction rows; the (1/sqrt(2)-scaled) weights carry sw in the
    # center-row slab and zeros elsewhere.
    _fill_col_stack(taps_ref, h, masks, C=C_out, C_pad=Cout_pad,
                    KW=KW, W=W, S=S, cdtype=cdtype)
    base = KW * Cout_pad
    taps_ref[base:base + C_in, :] = x.astype(cdtype)
    if Cin_pad > C_in:
        taps_ref[base + C_in:base + Cin_pad, :] = jnp.zeros(
            (Cin_pad - C_in, S), cdtype)
    out = _conv_from_stack(taps_ref, w2_ref, cb2sb_ref[...],
                           n_rows=KW * Cout_pad + Cin_pad, KH=KH, W=W,
                           mm_precision=mm_precision)                # Conv2+skip
    o_ref[...] = out.astype(o_ref.dtype)


# ----------------------------- host-side helpers ---------------------------
def _group_mean_matrix(C, groups, S):
    cg = C // groups
    gid = jnp.arange(C) // cg
    same = (gid[:, None] == gid[None, :]).astype(jnp.float32)
    return same / float(cg * S)


def _round_up(n, m):
    return (n + m - 1) // m * m


def _pack_conv_weights(w, c_src, c_pad):
    """(C_out, C_src, KH, KW) -> (KH, C_out, KW*c_pad) slabs matching the
    column-shift stack layout (dx-major, channel-minor, sublane-padded)."""
    C_out, _, KH, KW = w.shape
    wt = jnp.transpose(w, (2, 3, 0, 1))                    # (KH, KW, C_out, C_src)
    wt = jnp.pad(wt, ((0, 0), (0, 0), (0, 0), (0, c_pad - c_src)))
    return jnp.transpose(wt, (0, 2, 1, 3)).reshape(KH, C_out, KW * c_pad)


def _pick_vmem_limit_bytes():
    """Chip-aware scoped-VMEM limit (v7x: 64 MiB physical, v5e/v6e: 128 MiB)."""
    try:
        cap = int(pltpu.get_tpu_info().vmem_capacity_bytes)
    except Exception:
        cap = 64 * 1024 * 1024
    return 64 * 1024 * 1024 if cap >= 128 * 1024 * 1024 else 48 * 1024 * 1024


def conv_block_pallas(x, emb, p, *, compute_dtype=jnp.bfloat16,
                      mm_precision=None, interpret=False):
    """Fused ConvBlock forward. x: (B, C_in, H, W) NCHW, emb: (B, E)."""
    B, C_in, H, W = x.shape
    S = H * W
    C_out, _, KH, KW = p["w1"].shape
    G1 = min(max(C_in // 4, 1), 32)
    G2 = min(max(C_out // 4, 1), 32)
    f32 = jnp.float32
    inv_sqrt2 = 1.0 / math.sqrt(2.0)

    # sublane packing of the stack dtype: 8 rows for 4-byte, 16 rows for 2-byte
    packing = 8 * (4 // jnp.dtype(compute_dtype).itemsize)
    Cin_pad = _round_up(C_in, packing)
    Cout_pad = _round_up(C_out, packing)

    # ----------------- XLA-side glue (layout + tiny FiLM linear) -----------
    x_flat = x.reshape(B, C_in, S).astype(f32)

    # FiLM: scale, shift = Linear(silu(emb)); fold the "+1" into the scale and
    # pack (scale+1, shift) into one per-sample column pair.
    ss = jnp.dot(_silu(emb.astype(f32)), p["fw"].T,
                 precision=lax.Precision.HIGHEST) + p["fb"]
    film = jnp.concatenate([ss[:, :C_out] + 1.0, ss[:, C_out:]], axis=1)
    film = film[:, :, None].astype(f32)                       # (B, 2*C_out, 1)

    # Conv1 weight slabs.
    w1s = _pack_conv_weights(p["w1"].astype(f32), C_in, Cin_pad)

    # Conv2 weight slabs with the 1x1 skip (center slab) appended and the
    # 1/sqrt(2) residual combine folded in.
    w2core = _pack_conv_weights(p["w2"].astype(f32), C_out, Cout_pad)
    sw_pad = jnp.pad(p["sw"].astype(f32), ((0, 0), (0, Cin_pad - C_in)))
    skip_cols = jnp.zeros((KH, C_out, Cin_pad), f32).at[KH // 2].set(sw_pad)
    w2s = jnp.concatenate([w2core, skip_cols], axis=2) * inv_sqrt2
    cb2sb = ((p["cb2"] + p["sb"]) * inv_sqrt2)[:, None].astype(f32)

    args = (
        x_flat, film,
        _group_mean_matrix(C_in, G1, S),
        p["g1"][:, None].astype(f32), p["b1"][:, None].astype(f32),
        w1s.astype(compute_dtype), p["cb1"][:, None].astype(f32),
        _group_mean_matrix(C_out, G2, S),
        p["g2"][:, None].astype(f32), p["b2"][:, None].astype(f32),
        w2s.astype(compute_dtype), cb2sb,
    )

    def _per_sample(a):
        nd = a.ndim
        return pl.BlockSpec((None,) + tuple(a.shape[1:]),
                            lambda i: (i,) + (0,) * (nd - 1))

    def _const(a):
        nd = a.ndim
        return pl.BlockSpec(tuple(a.shape), lambda i: (0,) * nd)

    in_specs = ([_per_sample(args[0]), _per_sample(args[1])]
                + [_const(a) for a in args[2:]])

    # Shared tap-stack scratch (conv1 layout vs conv2 layout + skip rows).
    taps_rows = max(KW * Cin_pad, KW * Cout_pad + Cin_pad)

    kernel = functools.partial(
        _conv_block_kernel, H=H, W=W, KH=KH, KW=KW,
        C_in=C_in, C_out=C_out, Cin_pad=Cin_pad, Cout_pad=Cout_pad,
        cdtype=compute_dtype, mm_precision=mm_precision)

    call_kwargs = dict(interpret=interpret)
    if not interpret:
        call_kwargs["compiler_params"] = pltpu.CompilerParams(
            dimension_semantics=("parallel",),
            vmem_limit_bytes=_pick_vmem_limit_bytes())

    # TODO(synk): for very large C*S add H-row spatial tiling with a circular
    # halo; for tiny S, lane-concatenate several samples per grid step.
    out_flat = pl.pallas_call(
        kernel,
        out_shape=jax.ShapeDtypeStruct((B, C_out, S), x.dtype),
        grid=(B,),
        in_specs=in_specs,
        out_specs=pl.BlockSpec((None, C_out, S), lambda i: (i, 0, 0)),
        scratch_shapes=[pltpu.VMEM((taps_rows, S), compute_dtype)],
        **call_kwargs,
    )(*args)
    return out_flat.reshape(B, C_out, H, W)


# ----------------------- pure-JAX reference (for checking) -----------------
def _ref_forward(x, emb, p, G1, G2):
    """Exact f32 reference (HIGHEST precision for all matmuls/convs)."""
    HIGH = lax.Precision.HIGHEST

    def gn(h, gamma, beta, groups, eps=1e-5):
        B, C, H, W = h.shape
        hg = h.reshape(B, groups, C // groups, H, W)
        mu = hg.mean(axis=(2, 3, 4), keepdims=True)
        var = ((hg - mu) ** 2).mean(axis=(2, 3, 4), keepdims=True)
        hg = (hg - mu) * lax.rsqrt(var + eps)
        h = hg.reshape(B, C, H, W)
        return h * gamma[None, :, None, None] + beta[None, :, None, None]

    def circ_conv(h, w, b):
        ph, pw = w.shape[2] // 2, w.shape[3] // 2
        hp = jnp.pad(h, ((0, 0), (0, 0), (ph, ph), (pw, pw)), mode="wrap")
        out = lax.conv_general_dilated(
            hp, w, (1, 1), "VALID",
            dimension_numbers=("NCHW", "OIHW", "NCHW"), precision=HIGH)
        return out + b[None, :, None, None]

    C_out = p["w1"].shape[0]
    h = gn(x, p["g1"], p["b1"], G1)
    h = _silu(h)
    h = circ_conv(h, p["w1"], p["cb1"])
    h = gn(h, p["g2"], p["b2"], G2)
    ss = jnp.dot(_silu(emb), p["fw"].T, precision=HIGH) + p["fb"]
    scale, shift = ss[:, :C_out], ss[:, C_out:]
    h = h * (scale[:, :, None, None] + 1.0) + shift[:, :, None, None]
    h = _silu(h)
    h = circ_conv(h, p["w2"], p["cb2"])
    skip = jnp.einsum("oc,bchw->bohw", p["sw"], x, precision=HIGH)
    skip = skip + p["sb"][None, :, None, None]
    return (h + skip) / jnp.sqrt(2.0)


if __name__ == "__main__":
    B, C_in, C_out, E, H, W, K = 2, 4, 8, 32, 16, 16, 3
    f32 = jnp.float32
    ks = jax.random.split(jax.random.PRNGKey(0), 16)

    x = jax.random.normal(ks[0], (B, C_in, H, W), f32)
    emb = jax.random.normal(ks[1], (B, E), f32)

    # deterministic synthetic parameters (shapes implied by ConvBlock.__init__)
    p = dict(
        g1=1.0 + 0.1 * jax.random.normal(ks[2], (C_in,), f32),
        b1=0.1 * jax.random.normal(ks[3], (C_in,), f32),
        w1=0.3 * jax.random.normal(ks[4], (C_out, C_in, K, K), f32),
        cb1=0.1 * jax.random.normal(ks[5], (C_out,), f32),
        g2=1.0 + 0.1 * jax.random.normal(ks[6], (C_out,), f32),
        b2=0.1 * jax.random.normal(ks[7], (C_out,), f32),
        fw=0.2 * jax.random.normal(ks[8], (2 * C_out, E), f32),
        fb=0.1 * jax.random.normal(ks[9], (2 * C_out,), f32),
        w2=0.2 * jax.random.normal(ks[10], (C_out, C_out, K, K), f32),
        cb2=0.1 * jax.random.normal(ks[11], (C_out,), f32),
        sw=0.3 * jax.random.normal(ks[12], (C_out, C_in), f32),
        sb=0.1 * jax.random.normal(ks[13], (C_out,), f32),
    )

    G1 = min(max(C_in // 4, 1), 32)
    G2 = min(max(C_out // 4, 1), 32)
    ref = _ref_forward(x, emb, p, G1, G2)

    # compiled TPU kernel (default fast path: bf16 MXU operands, f32 accum)
    out = conv_block_pallas(x, emb, p)
    jax.block_until_ready(out)
    assert out.shape == (B, C_out, H, W)
    err_max = float(jnp.max(jnp.abs(out - ref)))
    err_rms = float(jnp.sqrt(jnp.mean(jnp.square(out - ref))))
    # bf16 matmul operands -> expect ~1e-2 scale max error (f32 accumulation)
    assert err_max < 5e-2, f"bf16-path max abs err too large: {err_max}"
    assert err_rms < 2e-2, f"bf16-path rms err too large: {err_rms}"

    # tight structural check: same kernel code, f32 matmuls at HIGHEST
    # precision, interpret mode => precision-exact vs. the reference.
    out_f32 = conv_block_pallas(x, emb, p, compute_dtype=jnp.float32,
                                mm_precision=lax.Precision.HIGHEST,
                                interpret=True)
    err_f32 = float(jnp.max(jnp.abs(out_f32 - ref)))
    assert err_f32 < 1e-4, f"f32-path max abs err too large: {err_f32}"

    print("KERNEL_OK")
</pallas_src>

<mosaic_0001>
module attributes {stable_mosaic.version = 11 : i64} {
  func.func @_conv_block_kernel(%arg0: i32, %arg1: memref<1x4x256xf32, #tpu.memory_space<vmem>>, %arg2: memref<1x16x1xf32, #tpu.memory_space<vmem>>, %arg3: memref<4x4xf32, #tpu.memory_space<vmem>>, %arg4: memref<4x1xf32, #tpu.memory_space<vmem>>, %arg5: memref<4x1xf32, #tpu.memory_space<vmem>>, %arg6: memref<3x8x48xbf16, #tpu.memory_space<vmem>>, %arg7: memref<8x1xf32, #tpu.memory_space<vmem>>, %arg8: memref<8x8xf32, #tpu.memory_space<vmem>>, %arg9: memref<8x1xf32, #tpu.memory_space<vmem>>, %arg10: memref<8x1xf32, #tpu.memory_space<vmem>>, %arg11: memref<3x8x64xbf16, #tpu.memory_space<vmem>>, %arg12: memref<8x1xf32, #tpu.memory_space<vmem>>, %arg13: memref<1x8x256xf32, #tpu.memory_space<vmem>>, %arg14: memref<64x256xbf16, #tpu.memory_space<vmem>>) attributes {dimension_semantics = [#tpu.dimension_semantics<parallel>], iteration_bounds = array<i64: 2>, scalar_prefetch = 0 : i64, scratch_operands = 1 : i64, tpu.core_type = #tpu.core_type<tc>, window_params = [{transform_indices = @transform_0, window_bounds = array<i64: 1, 4, 256>}, {transform_indices = @transform_1, window_bounds = array<i64: 1, 16, 1>}, {pipeline_mode = #tpu.pipeline_mode<synchronous>, transform_indices = @transform_2, window_bounds = array<i64: 4, 4>}, {pipeline_mode = #tpu.pipeline_mode<synchronous>, transform_indices = @transform_3, window_bounds = array<i64: 4, 1>}, {pipeline_mode = #tpu.pipeline_mode<synchronous>, transform_indices = @transform_4, window_bounds = array<i64: 4, 1>}, {pipeline_mode = #tpu.pipeline_mode<synchronous>, transform_indices = @transform_5, window_bounds = array<i64: 3, 8, 48>}, {pipeline_mode = #tpu.pipeline_mode<synchronous>, transform_indices = @transform_6, window_bounds = array<i64: 8, 1>}, {pipeline_mode = #tpu.pipeline_mode<synchronous>, transform_indices = @transform_7, window_bounds = array<i64: 8, 8>}, {pipeline_mode = #tpu.pipeline_mode<synchronous>, transform_indices = @transform_8, window_bounds = array<i64: 8, 1>}, {pipeline_mode = #tpu.pipeline_mode<synchronous>, transform_indices = @transform_9, window_bounds = array<i64: 8, 1>}, {pipeline_mode = #tpu.pipeline_mode<synchronous>, transform_indices = @transform_10, window_bounds = array<i64: 3, 8, 64>}, {pipeline_mode = #tpu.pipeline_mode<synchronous>, transform_indices = @transform_11, window_bounds = array<i64: 8, 1>}, {transform_indices = @transform_12, window_bounds = array<i64: 1, 8, 256>}]} {
    %0 = tpu.iota {dimensions = array<i32: 1>} : vector<1x256xi32>
    %c15_i32 = arith.constant 15 : i32
    %1 = vector.broadcast %c15_i32 : i32 to vector<1x256xi32>
    %2 = arith.andi %0, %1 : vector<1x256xi32>
    %c1_i32 = arith.constant 1 : i32
    %3 = vector.broadcast %c1_i32 : i32 to vector<1x256xi32>
    %4 = arith.cmpi slt, %2, %3 : vector<1x256xi32>
    %c15_i32_0 = arith.constant 15 : i32
    %5 = vector.broadcast %c15_i32_0 : i32 to vector<1x256xi32>
    %6 = arith.cmpi sge, %2, %5 : vector<1x256xi32>
    %c0 = arith.constant 0 : index
    %c0_1 = arith.constant 0 : index
    %c0_2 = arith.constant 0 : index
    %7 = vector.load %arg1[%c0, %c0_1, %c0_2] : memref<1x4x256xf32, #tpu.memory_space<vmem>>, vector<1x4x256xf32>
    %8 = vector.shape_cast %7 : vector<1x4x256xf32> to vector<4x256xf32>
    %c0_3 = arith.constant 0 : index
    %c0_4 = arith.constant 0 : index
    %9 = vector.load %arg4[%c0_3, %c0_4] : memref<4x1xf32, #tpu.memory_space<vmem>>, vector<4x1xf32>
    %c0_5 = arith.constant 0 : index
    %c0_6 = arith.constant 0 : index
    %10 = vector.load %arg5[%c0_5, %c0_6] : memref<4x1xf32, #tpu.memory_space<vmem>>, vector<4x1xf32>
    %c0_7 = arith.constant 0 : index
    %c0_8 = arith.constant 0 : index
    %11 = vector.load %arg3[%c0_7, %c0_8] : memref<4x4xf32, #tpu.memory_space<vmem>>, vector<4x4xf32>
    %cst = arith.constant dense<0.000000e+00> : vector<4xf32>
    %12 = vector.multi_reduction <add>, %8, %cst [1] : vector<4x256xf32> to vector<4xf32>
    %13 = vector.shape_cast %12 : vector<4xf32> to vector<4x1xf32>
    %cst_9 = arith.constant dense<0.000000e+00> : vector<4x1xf32>
    %14 = tpu.matmul %11, %13, %cst_9 {dimension_numbers = #tpu.dot_dimension_numbers<[1], [0], [0], [1], [0, 0, 1, 1], [], []>, precision = #tpu.contract_precision<fp32>} : vector<4x4xf32>, vector<4x1xf32>, vector<4x1xf32> -> vector<4x1xf32>
    %15 = vector.broadcast %14 : vector<4x1xf32> to vector<4x256xf32>
    %16 = arith.subf %8, %15 : vector<4x256xf32>
    %17 = arith.mulf %16, %16 : vector<4x256xf32>
    %cst_10 = arith.constant dense<0.000000e+00> : vector<4xf32>
    %18 = vector.multi_reduction <add>, %17, %cst_10 [1] : vector<4x256xf32> to vector<4xf32>
    %19 = vector.shape_cast %18 : vector<4xf32> to vector<4x1xf32>
    %cst_11 = arith.constant dense<0.000000e+00> : vector<4x1xf32>
    %20 = tpu.matmul %11, %19, %cst_11 {dimension_numbers = #tpu.dot_dimension_numbers<[1], [0], [0], [1], [0, 0, 1, 1], [], []>, precision = #tpu.contract_precision<fp32>} : vector<4x4xf32>, vector<4x1xf32>, vector<4x1xf32> -> vector<4x1xf32>
    %cst_12 = arith.constant 9.99999974E-6 : f32
    %21 = vector.broadcast %cst_12 : f32 to vector<4x1xf32>
    %22 = arith.addf %20, %21 : vector<4x1xf32>
    %23 = math.rsqrt %22 : vector<4x1xf32>
    %24 = vector.broadcast %23 : vector<4x1xf32> to vector<4x256xf32>
    %25 = arith.mulf %16, %24 : vector<4x256xf32>
    %26 = vector.broadcast %9 : vector<4x1xf32> to vector<4x256xf32>
    %27 = arith.mulf %25, %26 : vector<4x256xf32>
    %28 = vector.broadcast %10 : vector<4x1xf32> to vector<4x256xf32>
    %29 = arith.addf %27, %28 : vector<4x256xf32>
    %30 = arith.negf %29 : vector<4x256xf32>
    %31 = math.exp %30 : vector<4x256xf32>
    %cst_13 = arith.constant 1.000000e+00 : f32
    %32 = vector.broadcast %cst_13 : f32 to vector<4x256xf32>
    %33 = arith.addf %32, %31 : vector<4x256xf32>
    %34 = arith.divf %32, %33 : vector<4x256xf32>
    %35 = arith.mulf %29, %34 : vector<4x256xf32>
    %36 = vector.extract_strided_slice %35 {offsets = [0, 15], sizes = [4, 241], strides = [1, 1]} : vector<4x256xf32> to vector<4x241xf32>
    %37 = vector.extract_strided_slice %35 {offsets = [0, 0], sizes = [4, 15], strides = [1, 1]} : vector<4x256xf32> to vector<4x15xf32>
    %38 = tpu.concatenate %36, %37 in 1 : vector<4x241xf32>, vector<4x15xf32> -> vector<4x256xf32>
    %39 = vector.extract_strided_slice %35 {offsets = [0, 255], sizes = [4, 1], strides = [1, 1]} : vector<4x256xf32> to vector<4x1xf32>
    %40 = vector.extract_strided_slice %35 {offsets = [0, 0], sizes = [4, 255], strides = [1, 1]} : vector<4x256xf32> to vector<4x255xf32>
    %41 = tpu.concatenate %39, %40 in 1 : vector<4x1xf32>, vector<4x255xf32> -> vector<4x256xf32>
    %42 = vector.shape_cast %4 : vector<1x256xi1> to vector<1x256xi1>
    %43 = vector.broadcast %42 : vector<1x256xi1> to vector<4x256xi1>
    %44 = arith.select %43, %38, %41 : vector<4x256xi1>, vector<4x256xf32>
    %45 = vector.extract_strided_slice %35 {offsets = [0, 241], sizes = [4, 15], strides = [1, 1]} : vector<4x256xf32> to vector<4x15xf32>
    %46 = vector.extract_strided_slice %35 {offsets = [0, 0], sizes = [4, 241], strides = [1, 1]} : vector<4x256xf32> to vector<4x241xf32>
    %47 = tpu.concatenate %45, %46 in 1 : vector<4x15xf32>, vector<4x241xf32> -> vector<4x256xf32>
    %48 = vector.extract_strided_slice %35 {offsets = [0, 1], sizes = [4, 255], strides = [1, 1]} : vector<4x256xf32> to vector<4x255xf32>
    %49 = vector.extract_strided_slice %35 {offsets = [0, 0], sizes = [4, 1], strides = [1, 1]} : vector<4x256xf32> to vector<4x1xf32>
    %50 = tpu.concatenate %48, %49 in 1 : vector<4x255xf32>, vector<4x1xf32> -> vector<4x256xf32>
    %51 = vector.shape_cast %6 : vector<1x256xi1> to vector<1x256xi1>
    %52 = vector.broadcast %51 : vector<1x256xi1> to vector<4x256xi1>
    %53 = arith.select %52, %47, %50 : vector<4x256xi1>, vector<4x256xf32>
    %54 = arith.truncf %44 : vector<4x256xf32> to vector<4x256xbf16>
    %c0_14 = arith.constant 0 : index
    %c0_15 = arith.constant 0 : index
    %55 = vector.load %arg14[%c0_14, %c0_15] : memref<64x256xbf16, #tpu.memory_space<vmem>>, vector<4x256xbf16>
    tpu.vector_store %arg14[%c0_14, %c0_15], %54 {strides = array<i32>} : memref<64x256xbf16, #tpu.memory_space<vmem>>, vector<4x256xbf16>,
    %cst_16 = arith.constant 0.000000e+00 : bf16
    %56 = vector.broadcast %cst_16 : bf16 to vector<12x256xbf16>
    %c4 = arith.constant 4 : index
    %c0_17 = arith.constant 0 : index
    %57 = vector.load %arg14[%c4, %c0_17] : memref<64x256xbf16, #tpu.memory_space<vmem>>, vector<12x256xbf16>
    tpu.vector_store %arg14[%c4, %c0_17], %56 {strides = array<i32>} : memref<64x256xbf16, #tpu.memory_space<vmem>>, vector<12x256xbf16>,
    %58 = arith.truncf %35 : vector<4x256xf32> to vector<4x256xbf16>
    %c16 = arith.constant 16 : index
    %c0_18 = arith.constant 0 : index
    %59 = vector.load %arg14[%c16, %c0_18] : memref<64x256xbf16, #tpu.memory_space<vmem>>, vector<4x256xbf16>
    tpu.vector_store %arg14[%c16, %c0_18], %58 {strides = array<i32>} : memref<64x256xbf16, #tpu.memory_space<vmem>>, vector<4x256xbf16>,
    %cst_19 = arith.constant 0.000000e+00 : bf16
    %60 = vector.broadcast %cst_19 : bf16 to vector<12x256xbf16>
    %c20 = arith.constant 20 : index
    %c0_20 = arith.constant 0 : index
    %61 = vector.load %arg14[%c20, %c0_20] : memref<64x256xbf16, #tpu.memory_space<vmem>>, vector<12x256xbf16>
    tpu.vector_store %arg14[%c20, %c0_20], %60 {strides = array<i32>} : memref<64x256xbf16, #tpu.memory_space<vmem>>, vector<12x256xbf16>,
    %62 = arith.truncf %53 : vector<4x256xf32> to vector<4x256xbf16>
    %c32 = arith.constant 32 : index
    %c0_21 = arith.constant 0 : index
    %63 = vector.load %arg14[%c32, %c0_21] : memref<64x256xbf16, #tpu.memory_space<vmem>>, vector<4x256xbf16>
    tpu.vector_store %arg14[%c32, %c0_21], %62 {strides = array<i32>} : memref<64x256xbf16, #tpu.memory_space<vmem>>, vector<4x256xbf16>,
    %cst_22 = arith.constant 0.000000e+00 : bf16
    %64 = vector.broadcast %cst_22 : bf16 to vector<12x256xbf16>
    %c36 = arith.constant 36 : index
    %c0_23 = arith.constant 0 : index
    %65 = vector.load %arg14[%c36, %c0_23] : memref<64x256xbf16, #tpu.memory_space<vmem>>, vector<12x256xbf16>
    tpu.vector_store %arg14[%c36, %c0_23], %64 {strides = array<i32>} : memref<64x256xbf16, #tpu.memory_space<vmem>>, vector<12x256xbf16>,
    %c0_24 = arith.constant 0 : index
    %c0_25 = arith.constant 0 : index
    %66 = vector.load %arg7[%c0_24, %c0_25] : memref<8x1xf32, #tpu.memory_space<vmem>>, vector<8x1xf32>
    %c0_26 = arith.constant 0 : index
    %c0_27 = arith.constant 0 : index
    %67 = vector.load %arg14[%c0_26, %c0_27] : memref<64x256xbf16, #tpu.memory_space<vmem>>, vector<48x256xbf16>
    %c0_28 = arith.constant 0 : index
    %c0_29 = arith.constant 0 : index
    %c0_30 = arith.constant 0 : index
    %68 = vector.load %arg6[%c0_28, %c0_29, %c0_30] : memref<3x8x48xbf16, #tpu.memory_space<vmem>>, vector<1x8x48xbf16>
    %69 = vector.shape_cast %68 : vector<1x8x48xbf16> to vector<8x48xbf16>
    %cst_31 = arith.constant dense<0.000000e+00> : vector<8x256xf32>
    %70 = tpu.matmul %69, %67, %cst_31 {dimension_numbers = #tpu.dot_dimension_numbers<[1], [0], [0], [1], [0, 0, 1, 1], [], []>} : vector<8x48xbf16>, vector<48x256xbf16>, vector<8x256xf32> -> vector<8x256xf32>
    %71 = vector.extract_strided_slice %70 {offsets = [0, 240], sizes = [8, 16], strides = [1, 1]} : vector<8x256xf32> to vector<8x16xf32>
    %72 = vector.extract_strided_slice %70 {offsets = [0, 0], sizes = [8, 240], strides = [1, 1]} : vector<8x256xf32> to vector<8x240xf32>
    %73 = tpu.concatenate %71, %72 in 1 : vector<8x16xf32>, vector<8x240xf32> -> vector<8x256xf32>
    %c1 = arith.constant 1 : index
    %c0_32 = arith.constant 0 : index
    %c0_33 = arith.constant 0 : index
    %74 = vector.load %arg6[%c1, %c0_32, %c0_33] : memref<3x8x48xbf16, #tpu.memory_space<vmem>>, vector<1x8x48xbf16>
    %75 = vector.shape_cast %74 : vector<1x8x48xbf16> to vector<8x48xbf16>
    %cst_34 = arith.constant dense<0.000000e+00> : vector<8x256xf32>
    %76 = tpu.matmul %75, %67, %cst_34 {dimension_numbers = #tpu.dot_dimension_numbers<[1], [0], [0], [1], [0, 0, 1, 1], [], []>} : vector<8x48xbf16>, vector<48x256xbf16>, vector<8x256xf32> -> vector<8x256xf32>
    %77 = arith.addf %73, %76 : vector<8x256xf32>
    %c2 = arith.constant 2 : index
    %c0_35 = arith.constant 0 : index
    %c0_36 = arith.constant 0 : index
    %78 = vector.load %arg6[%c2, %c0_35, %c0_36] : memref<3x8x48xbf16, #tpu.memory_space<vmem>>, vector<1x8x48xbf16>
    %79 = vector.shape_cast %78 : vector<1x8x48xbf16> to vector<8x48xbf16>
    %cst_37 = arith.constant dense<0.000000e+00> : vector<8x256xf32>
    %80 = tpu.matmul %79, %67, %cst_37 {dimension_numbers = #tpu.dot_dimension_numbers<[1], [0], [0], [1], [0, 0, 1, 1], [], []>} : vector<8x48xbf16>, vector<48x256xbf16>, vector<8x256xf32> -> vector<8x256xf32>
    %81 = vector.extract_strided_slice %80 {offsets = [0, 16], sizes = [8, 240], strides = [1, 1]} : vector<8x256xf32> to vector<8x240xf32>
    %82 = vector.extract_strided_slice %80 {offsets = [0, 0], sizes = [8, 16], strides = [1, 1]} : vector<8x256xf32> to vector<8x16xf32>
    %83 = tpu.concatenate %81, %82 in 1 : vector<8x240xf32>, vector<8x16xf32> -> vector<8x256xf32>
    %84 = arith.addf %77, %83 : vector<8x256xf32>
    %85 = vector.broadcast %66 : vector<8x1xf32> to vector<8x256xf32>
    %86 = arith.addf %84, %85 : vector<8x256xf32>
    %c0_38 = arith.constant 0 : index
    %c0_39 = arith.constant 0 : index
    %87 = vector.load %arg9[%c0_38, %c0_39] : memref<8x1xf32, #tpu.memory_space<vmem>>, vector<8x1xf32>
    %c0_40 = arith.constant 0 : index
    %c0_41 = arith.constant 0 : index
    %88 = vector.load %arg10[%c0_40, %c0_41] : memref<8x1xf32, #tpu.memory_space<vmem>>, vector<8x1xf32>
    %c0_42 = arith.constant 0 : index
    %c0_43 = arith.constant 0 : index
    %89 = vector.load %arg8[%c0_42, %c0_43] : memref<8x8xf32, #tpu.memory_space<vmem>>, vector<8x8xf32>
    %cst_44 = arith.constant dense<0.000000e+00> : vector<8xf32>
    %90 = vector.multi_reduction <add>, %86, %cst_44 [1] : vector<8x256xf32> to vector<8xf32>
    %91 = vector.shape_cast %90 : vector<8xf32> to vector<8x1xf32>
    %cst_45 = arith.constant dense<0.000000e+00> : vector<8x1xf32>
    %92 = tpu.matmul %89, %91, %cst_45 {dimension_numbers = #tpu.dot_dimension_numbers<[1], [0], [0], [1], [0, 0, 1, 1], [], []>, precision = #tpu.contract_precision<fp32>} : vector<8x8xf32>, vector<8x1xf32>, vector<8x1xf32> -> vector<8x1xf32>
    %93 = vector.broadcast %92 : vector<8x1xf32> to vector<8x256xf32>
    %94 = arith.subf %86, %93 : vector<8x256xf32>
    %95 = arith.mulf %94, %94 : vector<8x256xf32>
    %cst_46 = arith.constant dense<0.000000e+00> : vector<8xf32>
    %96 = vector.multi_reduction <add>, %95, %cst_46 [1] : vector<8x256xf32> to vector<8xf32>
    %97 = vector.shape_cast %96 : vector<8xf32> to vector<8x1xf32>
    %cst_47 = arith.constant dense<0.000000e+00> : vector<8x1xf32>
    %98 = tpu.matmul %89, %97, %cst_47 {dimension_numbers = #tpu.dot_dimension_numbers<[1], [0], [0], [1], [0, 0, 1, 1], [], []>, precision = #tpu.contract_precision<fp32>} : vector<8x8xf32>, vector<8x1xf32>, vector<8x1xf32> -> vector<8x1xf32>
    %cst_48 = arith.constant 9.99999974E-6 : f32
    %99 = vector.broadcast %cst_48 : f32 to vector<8x1xf32>
    %100 = arith.addf %98, %99 : vector<8x1xf32>
    %101 = math.rsqrt %100 : vector<8x1xf32>
    %102 = vector.broadcast %101 : vector<8x1xf32> to vector<8x256xf32>
    %103 = arith.mulf %94, %102 : vector<8x256xf32>
    %104 = vector.broadcast %87 : vector<8x1xf32> to vector<8x256xf32>
    %105 = arith.mulf %103, %104 : vector<8x256xf32>
    %106 = vector.broadcast %88 : vector<8x1xf32> to vector<8x256xf32>
    %107 = arith.addf %105, %106 : vector<8x256xf32>
    %c0_49 = arith.constant 0 : index
    %c0_50 = arith.constant 0 : index
    %c0_51 = arith.constant 0 : index
    %108 = vector.load %arg2[%c0_49, %c0_50, %c0_51] : memref<1x16x1xf32, #tpu.memory_space<vmem>>, vector<1x16x1xf32>
    %109 = vector.shape_cast %108 : vector<1x16x1xf32> to vector<16x1xf32>
    %110 = vector.extract_strided_slice %109 {offsets = [0, 0], sizes = [8, 1], strides = [1, 1]} : vector<16x1xf32> to vector<8x1xf32>
    %111 = vector.broadcast %110 : vector<8x1xf32> to vector<8x256xf32>
    %112 = arith.mulf %107, %111 : vector<8x256xf32>
    %113 = vector.extract_strided_slice %109 {offsets = [8, 0], sizes = [8, 1], strides = [1, 1]} : vector<16x1xf32> to vector<8x1xf32>
    %114 = vector.broadcast %113 : vector<8x1xf32> to vector<8x256xf32>
    %115 = arith.addf %112, %114 : vector<8x256xf32>
    %116 = arith.negf %115 : vector<8x256xf32>
    %117 = math.exp %116 : vector<8x256xf32>
    %cst_52 = arith.constant 1.000000e+00 : f32
    %118 = vector.broadcast %cst_52 : f32 to vector<8x256xf32>
    %119 = arith.addf %118, %117 : vector<8x256xf32>
    %120 = arith.divf %118, %119 : vector<8x256xf32>
    %121 = arith.mulf %115, %120 : vector<8x256xf32>
    %122 = vector.extract_strided_slice %121 {offsets = [0, 15], sizes = [8, 241], strides = [1, 1]} : vector<8x256xf32> to vector<8x241xf32>
    %123 = vector.extract_strided_slice %121 {offsets = [0, 0], sizes = [8, 15], strides = [1, 1]} : vector<8x256xf32> to vector<8x15xf32>
    %124 = tpu.concatenate %122, %123 in 1 : vector<8x241xf32>, vector<8x15xf32> -> vector<8x256xf32>
    %125 = vector.extract_strided_slice %121 {offsets = [0, 255], sizes = [8, 1], strides = [1, 1]} : vector<8x256xf32> to vector<8x1xf32>
    %126 = vector.extract_strided_slice %121 {offsets = [0, 0], sizes = [8, 255], strides = [1, 1]} : vector<8x256xf32> to vector<8x255xf32>
    %127 = tpu.concatenate %125, %126 in 1 : vector<8x1xf32>, vector<8x255xf32> -> vector<8x256xf32>
    %128 = vector.shape_cast %4 : vector<1x256xi1> to vector<1x256xi1>
    %129 = vector.broadcast %128 : vector<1x256xi1> to vector<8x256xi1>
    %130 = arith.select %129, %124, %127 : vector<8x256xi1>, vector<8x256xf32>
    %131 = vector.extract_strided_slice %121 {offsets = [0, 241], sizes = [8, 15], strides = [1, 1]} : vector<8x256xf32> to vector<8x15xf32>
    %132 = vector.extract_strided_slice %121 {offsets = [0, 0], sizes = [8, 241], strides = [1, 1]} : vector<8x256xf32> to vector<8x241xf32>
    %133 = tpu.concatenate %131, %132 in 1 : vector<8x15xf32>, vector<8x241xf32> -> vector<8x256xf32>
    %134 = vector.extract_strided_slice %121 {offsets = [0, 1], sizes = [8, 255], strides = [1, 1]} : vector<8x256xf32> to vector<8x255xf32>
    %135 = vector.extract_strided_slice %121 {offsets = [0, 0], sizes = [8, 1], strides = [1, 1]} : vector<8x256xf32> to vector<8x1xf32>
    %136 = tpu.concatenate %134, %135 in 1 : vector<8x255xf32>, vector<8x1xf32> -> vector<8x256xf32>
    %137 = vector.shape_cast %6 : vector<1x256xi1> to vector<1x256xi1>
    %138 = vector.broadcast %137 : vector<1x256xi1> to vector<8x256xi1>
    %139 = arith.select %138, %133, %136 : vector<8x256xi1>, vector<8x256xf32>
    %140 = arith.truncf %130 : vector<8x256xf32> to vector<8x256xbf16>
    %c0_53 = arith.constant 0 : index
    %c0_54 = arith.constant 0 : index
    %141 = vector.load %arg14[%c0_53, %c0_54] : memref<64x256xbf16, #tpu.memory_space<vmem>>, vector<8x256xbf16>
    tpu.vector_store %arg14[%c0_53, %c0_54], %140 {strides = array<i32>} : memref<64x256xbf16, #tpu.memory_space<vmem>>, vector<8x256xbf16>,
    %cst_55 = arith.constant 0.000000e+00 : bf16
    %142 = vector.broadcast %cst_55 : bf16 to vector<8x256xbf16>
    %c8 = arith.constant 8 : index
    %c0_56 = arith.constant 0 : index
    %143 = vector.load %arg14[%c8, %c0_56] : memref<64x256xbf16, #tpu.memory_space<vmem>>, vector<8x256xbf16>
    tpu.vector_store %arg14[%c8, %c0_56], %142 {strides = array<i32>} : memref<64x256xbf16, #tpu.memory_space<vmem>>, vector<8x256xbf16>,
    %144 = arith.truncf %121 : vector<8x256xf32> to vector<8x256xbf16>
    %c16_57 = arith.constant 16 : index
    %c0_58 = arith.constant 0 : index
    %145 = vector.load %arg14[%c16_57, %c0_58] : memref<64x256xbf16, #tpu.memory_space<vmem>>, vector<8x256xbf16>
    tpu.vector_store %arg14[%c16_57, %c0_58], %144 {strides = array<i32>} : memref<64x256xbf16, #tpu.memory_space<vmem>>, vector<8x256xbf16>,
    %cst_59 = arith.constant 0.000000e+00 : bf16
    %146 = vector.broadcast %cst_59 : bf16 to vector<8x256xbf16>
    %c24 = arith.constant 24 : index
    %c0_60 = arith.constant 0 : index
    %147 = vector.load %arg14[%c24, %c0_60] : memref<64x256xbf16, #tpu.memory_space<vmem>>, vector<8x256xbf16>
    tpu.vector_store %arg14[%c24, %c0_60], %146 {strides = array<i32>} : memref<64x256xbf16, #tpu.memory_space<vmem>>, vector<8x256xbf16>,
    %148 = arith.truncf %139 : vector<8x256xf32> to vector<8x256xbf16>
    %c32_61 = arith.constant 32 : index
    %c0_62 = arith.constant 0 : index
    %149 = vector.load %arg14[%c32_61, %c0_62] : memref<64x256xbf16, #tpu.memory_space<vmem>>, vector<8x256xbf16>
    tpu.vector_store %arg14[%c32_61, %c0_62], %148 {strides = array<i32>} : memref<64x256xbf16, #tpu.memory_space<vmem>>, vector<8x256xbf16>,
    %cst_63 = arith.constant 0.000000e+00 : bf16
    %150 = vector.broadcast %cst_63 : bf16 to vector<8x256xbf16>
    %c40 = arith.constant 40 : index
    %c0_64 = arith.constant 0 : index
    %151 = vector.load %arg14[%c40, %c0_64] : memref<64x256xbf16, #tpu.memory_space<vmem>>, vector<8x256xbf16>
    tpu.vector_store %arg14[%c40, %c0_64], %150 {strides = array<i32>} : memref<64x256xbf16, #tpu.memory_space<vmem>>, vector<8x256xbf16>,
    %152 = arith.truncf %8 : vector<4x256xf32> to vector<4x256xbf16>
    %c48 = arith.constant 48 : index
    %c0_65 = arith.constant 0 : index
    %153 = vector.load %arg14[%c48, %c0_65] : memref<64x256xbf16, #tpu.memory_space<vmem>>, vector<4x256xbf16>
    tpu.vector_store %arg14[%c48, %c0_65], %152 {strides = array<i32>} : memref<64x256xbf16, #tpu.memory_space<vmem>>, vector<4x256xbf16>,
    %cst_66 = arith.constant 0.000000e+00 : bf16
    %154 = vector.broadcast %cst_66 : bf16 to vector<12x256xbf16>
    %c52 = arith.constant 52 : index
    %c0_67 = arith.constant 0 : index
    %155 = vector.load %arg14[%c52, %c0_67] : memref<64x256xbf16, #tpu.memory_space<vmem>>, vector<12x256xbf16>
    tpu.vector_store %arg14[%c52, %c0_67], %154 {strides = array<i32>} : memref<64x256xbf16, #tpu.memory_space<vmem>>, vector<12x256xbf16>,
    %c0_68 = arith.constant 0 : index
    %c0_69 = arith.constant 0 : index
    %156 = vector.load %arg12[%c0_68, %c0_69] : memref<8x1xf32, #tpu.memory_space<vmem>>, vector<8x1xf32>
    %c0_70 = arith.constant 0 : index
    %c0_71 = arith.constant 0 : index
    %157 = vector.load %arg14[%c0_70, %c0_71] : memref<64x256xbf16, #tpu.memory_space<vmem>>, vector<64x256xbf16>
    %c0_72 = arith.constant 0 : index
    %c0_73 = arith.constant 0 : index
    %c0_74 = arith.constant 0 : index
    %158 = vector.load %arg11[%c0_72, %c0_73, %c0_74] : memref<3x8x64xbf16, #tpu.memory_space<vmem>>, vector<1x8x64xbf16>
    %159 = vector.shape_cast %158 : vector<1x8x64xbf16> to vector<8x64xbf16>
    %cst_75 = arith.constant dense<0.000000e+00> : vector<8x256xf32>
    %160 = tpu.matmul %159, %157, %cst_75 {dimension_numbers = #tpu.dot_dimension_numbers<[1], [0], [0], [1], [0, 0, 1, 1], [], []>} : vector<8x64xbf16>, vector<64x256xbf16>, vector<8x256xf32> -> vector<8x256xf32>
    %161 = vector.extract_strided_slice %160 {offsets = [0, 240], sizes = [8, 16], strides = [1, 1]} : vector<8x256xf32> to vector<8x16xf32>
    %162 = vector.extract_strided_slice %160 {offsets = [0, 0], sizes = [8, 240], strides = [1, 1]} : vector<8x256xf32> to vector<8x240xf32>
    %163 = tpu.concatenate %161, %162 in 1 : vector<8x16xf32>, vector<8x240xf32> -> vector<8x256xf32>
    %c1_76 = arith.constant 1 : index
    %c0_77 = arith.constant 0 : index
    %c0_78 = arith.constant 0 : index
    %164 = vector.load %arg11[%c1_76, %c0_77, %c0_78] : memref<3x8x64xbf16, #tpu.memory_space<vmem>>, vector<1x8x64xbf16>
    %165 = vector.shape_cast %164 : vector<1x8x64xbf16> to vector<8x64xbf16>
    %cst_79 = arith.constant dense<0.000000e+00> : vector<8x256xf32>
    %166 = tpu.matmul %165, %157, %cst_79 {dimension_numbers = #tpu.dot_dimension_numbers<[1], [0], [0], [1], [0, 0, 1, 1], [], []>} : vector<8x64xbf16>, vector<64x256xbf16>, vector<8x256xf32> -> vector<8x256xf32>
    %167 = arith.addf %163, %166 : vector<8x256xf32>
    %c2_80 = arith.constant 2 : index
    %c0_81 = arith.constant 0 : index
    %c0_82 = arith.constant 0 : index
    %168 = vector.load %arg11[%c2_80, %c0_81, %c0_82] : memref<3x8x64xbf16, #tpu.memory_space<vmem>>, vector<1x8x64xbf16>
    %169 = vector.shape_cast %168 : vector<1x8x64xbf16> to vector<8x64xbf16>
    %cst_83 = arith.constant dense<0.000000e+00> : vector<8x256xf32>
    %170 = tpu.matmul %169, %157, %cst_83 {dimension_numbers = #tpu.dot_dimension_numbers<[1], [0], [0], [1], [0, 0, 1, 1], [], []>} : vector<8x64xbf16>, vector<64x256xbf16>, vector<8x256xf32> -> vector<8x256xf32>
    %171 = vector.extract_strided_slice %170 {offsets = [0, 16], sizes = [8, 240], strides = [1, 1]} : vector<8x256xf32> to vector<8x240xf32>
    %172 = vector.extract_strided_slice %170 {offsets = [0, 0], sizes = [8, 16], strides = [1, 1]} : vector<8x256xf32> to vector<8x16xf32>
    %173 = tpu.concatenate %171, %172 in 1 : vector<8x240xf32>, vector<8x16xf32> -> vector<8x256xf32>
    %174 = arith.addf %167, %173 : vector<8x256xf32>
    %175 = vector.broadcast %156 : vector<8x1xf32> to vector<8x256xf32>
    %176 = arith.addf %174, %175 : vector<8x256xf32>
    %c0_84 = arith.constant 0 : index
    %c0_85 = arith.constant 0 : index
    %c0_86 = arith.constant 0 : index
    %177 = vector.load %arg13[%c0_84, %c0_85, %c0_86] : memref<1x8x256xf32, #tpu.memory_space<vmem>>, vector<1x8x256xf32>
    %178 = vector.shape_cast %177 : vector<1x8x256xf32> to vector<8x256xf32>
    %179 = vector.shape_cast %176 : vector<8x256xf32> to vector<1x8x256xf32>
    tpu.vector_store %arg13[%c0_84, %c0_85, %c0_86], %179 {strides = array<i32>} : memref<1x8x256xf32, #tpu.memory_space<vmem>>, vector<1x8x256xf32>,
    return
  }
  func.func @transform_0(%arg0: i32) -> (i32, i32, i32) {
    %c0_i32 = arith.constant 0 : i32
    %c0_i32_0 = arith.constant 0 : i32
    %c0_i32_1 = arith.constant 0 : i32
    return %arg0, %c0_i32, %c0_i32_0 : i32, i32, i32
  }
  func.func @transform_1(%arg0: i32) -> (i32, i32, i32) {
    %c0_i32 = arith.constant 0 : i32
    %c0_i32_0 = arith.constant 0 : i32
    %c0_i32_1 = arith.constant 0 : i32
    return %arg0, %c0_i32, %c0_i32_0 : i32, i32, i32
  }
  func.func @transform_2(%arg0: i32) -> (i32, i32) {
    %c0_i32 = arith.constant 0 : i32
    %c0_i32_0 = arith.constant 0 : i32
    %c0_i32_1 = arith.constant 0 : i32
    return %c0_i32, %c0_i32_0 : i32, i32
  }
  func.func @transform_3(%arg0: i32) -> (i32, i32) {
    %c0_i32 = arith.constant 0 : i32
    %c0_i32_0 = arith.constant 0 : i32
    %c0_i32_1 = arith.constant 0 : i32
    return %c0_i32, %c0_i32_0 : i32, i32
  }
  func.func @transform_4(%arg0: i32) -> (i32, i32) {
    %c0_i32 = arith.constant 0 : i32
    %c0_i32_0 = arith.constant 0 : i32
    %c0_i32_1 = arith.constant 0 : i32
    return %c0_i32, %c0_i32_0 : i32, i32
  }
  func.func @transform_5(%arg0: i32) -> (i32, i32, i32) {
    %c0_i32 = arith.constant 0 : i32
    %c0_i32_0 = arith.constant 0 : i32
    %c0_i32_1 = arith.constant 0 : i32
    %c0_i32_2 = arith.constant 0 : i32
    return %c0_i32, %c0_i32_0, %c0_i32_1 : i32, i32, i32
  }
  func.func @transform_6(%arg0: i32) -> (i32, i32) {
    %c0_i32 = arith.constant 0 : i32
    %c0_i32_0 = arith.constant 0 : i32
    %c0_i32_1 = arith.constant 0 : i32
    return %c0_i32, %c0_i32_0 : i32, i32
  }
  func.func @transform_7(%arg0: i32) -> (i32, i32) {
    %c0_i32 = arith.constant 0 : i32
    %c0_i32_0 = arith.constant 0 : i32
    %c0_i32_1 = arith.constant 0 : i32
    return %c0_i32, %c0_i32_0 : i32, i32
  }
  func.func @transform_8(%arg0: i32) -> (i32, i32) {
    %c0_i32 = arith.constant 0 : i32
    %c0_i32_0 = arith.constant 0 : i32
    %c0_i32_1 = arith.constant 0 : i32
    return %c0_i32, %c0_i32_0 : i32, i32
  }
  func.func @transform_9(%arg0: i32) -> (i32, i32) {
    %c0_i32 = arith.constant 0 : i32
    %c0_i32_0 = arith.constant 0 : i32
    %c0_i32_1 = arith.constant 0 : i32
    return %c0_i32, %c0_i32_0 : i32, i32
  }
  func.func @transform_10(%arg0: i32) -> (i32, i32, i32) {
    %c0_i32 = arith.constant 0 : i32
    %c0_i32_0 = arith.constant 0 : i32
    %c0_i32_1 = arith.constant 0 : i32
    %c0_i32_2 = arith.constant 0 : i32
    return %c0_i32, %c0_i32_0, %c0_i32_1 : i32, i32, i32
  }
  func.func @transform_11(%arg0: i32) -> (i32, i32) {
    %c0_i32 = arith.constant 0 : i32
    %c0_i32_0 = arith.constant 0 : i32
    %c0_i32_1 = arith.constant 0 : i32
    return %c0_i32, %c0_i32_0 : i32, i32
  }
  func.func @transform_12(%arg0: i32) -> (i32, i32, i32) {
    %c0_i32 = arith.constant 0 : i32
    %c0_i32_0 = arith.constant 0 : i32
    %c0_i32_1 = arith.constant 0 : i32
    return %arg0, %c0_i32, %c0_i32_0 : i32, i32, i32
  }
}

</mosaic_0001>

<llo_original>
// kernel: tpu_custom_call.1
$region0: #{tpu_custom_call.1}
  #allocation0 [shape = 'u32[]', space=smem, size = 0x4, offset = 0x4, fixed_abs, tag = 'smem constant byte address 0x4 - core index']
  #allocation1 [shape = 'u32[72,128]{1,0:T(1,128)}', space=vmem, size = 0x9000, scoped, tag = 'internal scratch']
  #allocation2 [shape = 'bf16[64,256]{1,0:T(8,128)(2,1)}', space=vmem, size = 0x8000, scoped, tag = 'scratch operand']
  %s0 = inlined_call_operand.vmem [shape: f32[2,4,256], index: 0, kind: input, shape index: {}]
  %s1 = inlined_call_operand.vmem [shape: f32[2,16,1], index: 1, kind: input, shape index: {}]
  %s2 = inlined_call_operand.vmem [shape: f32[4,4], index: 2, kind: input, shape index: {}]
  %s3 = inlined_call_operand.vmem [shape: f32[4,1], index: 3, kind: input, shape index: {}]
  %s4 = inlined_call_operand.vmem [shape: f32[4,1], index: 4, kind: input, shape index: {}]
  %s5 = inlined_call_operand.vmem [shape: bf16[3,8,48], index: 5, kind: input, shape index: {}]
  %s6 = inlined_call_operand.vmem [shape: f32[8,1], index: 6, kind: input, shape index: {}]
  %s7 = inlined_call_operand.vmem [shape: f32[8,8], index: 7, kind: input, shape index: {}]
  %s8 = inlined_call_operand.vmem [shape: f32[8,1], index: 8, kind: input, shape index: {}]
  %s9 = inlined_call_operand.vmem [shape: f32[8,1], index: 9, kind: input, shape index: {}]
  %s10 = inlined_call_operand.vmem [shape: bf16[3,8,64], index: 10, kind: input, shape index: {}]
  %s11 = inlined_call_operand.vmem [shape: f32[8,1], index: 11, kind: input, shape index: {}]
  %s12 = inlined_call_operand.hbm [shape: f32[2,8,256], index: 12, kind: output, shape index: {}]
  %s13 = sld [smem:[#allocation0]]
  $region81: #{tpu_custom_call.1} parent=0
    _
  %s15 = ssub.s32 1, %s13
  %s16 = scalar_select 0, %s15, %s13
  $region1: #{tpu_custom_call.1} parent=0
    #allocation3 [shape = 'u8[16384]{0}', space=vmem, size = 0x4000, scoped, tag = 'output window, operand 0']
    #allocation4 [shape = 's32[2]{0}', space=sflag, size = 0x8, scoped, tag = 'scoped memory for tpu_custom_call.1']
    %17 = vsyncpa [#allocation4], 0
    %s18 = scalar_lea.sflag [#allocation4], 1
    %19 = vsyncpa %s18, 0
    loop: start=0, step=1, limit=4
    $region2: #{tpu_custom_call.1} parent=1 // loop_pre_header
      _
    $region3: #{tpu_custom_call.1} parent=1 // loop_header
      %s21 = sphi 0, %s25
      %p22 = scmp.ge.s32.totalorder %s21, 4
      %s31 = sphi 0, %s33
      %s34 = sphi 0, %s31
      %s35 = sphi 0, %s34
      %s51 = sphi 0, %s35
      %s57 = sphi 0, %s59
      %s60 = sphi 0, %s57
      %s61 = sphi 0, %s60
      %s77 = sphi 0, %s61
      %s81 = sphi 0, %s81
      %s83 = sphi 0, %s81
      %s84 = sphi 0, %s83
      %s98 = sphi 0, %s84
      %s102 = sphi 0, %s102
      %s104 = sphi 0, %s102
      %s105 = sphi 0, %s104
      %s119 = sphi 0, %s105
      %s123 = sphi 0, %s123
      %s125 = sphi 0, %s123
      %s126 = sphi 0, %s125
      %s140 = sphi 0, %s126
      %s144 = sphi 0, %s144
      %s146 = sphi 0, %s144
      %s147 = sphi 0, %s146
      %s161 = sphi 0, %s147
      %s165 = sphi 0, %s165
      %s167 = sphi 0, %s165
      %s168 = sphi 0, %s167
      %s182 = sphi 0, %s168
      %s186 = sphi 0, %s186
      %s188 = sphi 0, %s186
      %s189 = sphi 0, %s188
      %s203 = sphi 0, %s189
      %s207 = sphi 0, %s207
      %s209 = sphi 0, %s207
      %s210 = sphi 0, %s209
      %s224 = sphi 0, %s210
      %s228 = sphi 0, %s228
      %s230 = sphi 0, %s228
      %s231 = sphi 0, %s230
      %s245 = sphi 0, %s231
      %s249 = sphi 0, %s249
      %s251 = sphi 0, %s249
      %s252 = sphi 0, %s251
      %s266 = sphi 0, %s252
      %s270 = sphi 0, %s270
      %s272 = sphi 0, %s270
      %s273 = sphi 0, %s272
      %s287 = sphi 0, %s273
      %s293 = sphi 0, %s295
      %s296 = sphi 0, %s293
      %s297 = sphi 0, %s296
      %s313 = sphi 0, %s297
    $region4: #{tpu_custom_call.1} parent=1 // loop_header_branch
      %24 = sbr.rel (%p22) target = $region8
    $region5: #{tpu_custom_call.1} parent=1 // loop_body
      %s26 = ssub.s32 %s21, 1
      %s27 = ssub.s32 %s21, 2
      %s28 = sadd.s32 %s21, 1
      %s29 = ssub.s32 %s21, %s28
      %p30 = scmp.eq.s32.totalorder %s29, 0
      %s32 = sadd.s32 %s31, 1
      %s33 = scalar_select %p30, %s31, %s32
      %p36 = pneg %p30
      %p37 = scmp.eq.s32.totalorder %s21, 1
      %p38 = por %p36, %p37
      %p39 = scmp.ne.s32.totalorder %s31, %s34
      %p40 = scmp.eq.s32.totalorder %s21, 0
      %p41 = por %p39, %p40
      %p42 = scmp.ne.s32.totalorder %s31, %s34
      %p43 = scmp.eq.s32.totalorder %s26, 1
      %p44 = por %p42, %p43
      %p45 = scmp.ne.s32.totalorder %s34, %s35
      %p46 = scmp.eq.s32.totalorder %s26, 0
      %p47 = por %p45, %p46
      %p48 = scmp.ne.s32.totalorder %s34, %s35
      %p49 = scmp.eq.s32.totalorder %s27, 1
      %p50 = por %p48, %p49
      %p52 = scmp.ne.s32.totalorder %s35, %s51
      %p53 = scmp.eq.s32.totalorder %s27, 0
      %p54 = por %p52, %p53
      %s55 = ssub.s32 %s21, %s28
      %p56 = scmp.eq.s32.totalorder %s55, 0
      %s58 = sadd.s32 %s57, 1
      %s59 = scalar_select %p56, %s57, %s58
      %p62 = pneg %p56
      %p63 = scmp.eq.s32.totalorder %s21, 1
      %p64 = por %p62, %p63
      %p65 = scmp.ne.s32.totalorder %s57, %s60
      %p66 = scmp.eq.s32.totalorder %s21, 0
      %p67 = por %p65, %p66
      %p68 = scmp.ne.s32.totalorder %s57, %s60
      %p69 = scmp.eq.s32.totalorder %s26, 1
      %p70 = por %p68, %p69
      %p71 = scmp.ne.s32.totalorder %s60, %s61
      %p72 = scmp.eq.s32.totalorder %s26, 0
      %p73 = por %p71, %p72
      %p74 = scmp.ne.s32.totalorder %s60, %s61
      %p75 = scmp.eq.s32.totalorder %s27, 1
      %p76 = por %p74, %p75
      %p78 = scmp.ne.s32.totalorder %s61, %s77
      %p79 = scmp.eq.s32.totalorder %s27, 0
      %p80 = por %p78, %p79
      %s82 = sadd.s32 %s81, 1
      %p85 = scmp.eq.s32.totalorder %s21, 1
      %p86 = scmp.ne.s32.totalorder %s81, %s83
      %p87 = scmp.eq.s32.totalorder %s21, 0
      %p88 = por %p86, %p87
      %p89 = scmp.ne.s32.totalorder %s81, %s83
      %p90 = scmp.eq.s32.totalorder %s26, 1
      %p91 = por %p89, %p90
      %p92 = scmp.ne.s32.totalorder %s83, %s84
      %p93 = scmp.eq.s32.totalorder %s26, 0
      %p94 = por %p92, %p93
      %p95 = scmp.ne.s32.totalorder %s83, %s84
      %p96 = scmp.eq.s32.totalorder %s27, 1
      %p97 = por %p95, %p96
      %p99 = scmp.ne.s32.totalorder %s84, %s98
      %p100 = scmp.eq.s32.totalorder %s27, 0
      %p101 = por %p99, %p100
      %s103 = sadd.s32 %s102, 1
      %p106 = scmp.eq.s32.totalorder %s21, 1
      %p107 = scmp.ne.s32.totalorder %s102, %s104
      %p108 = scmp.eq.s32.totalorder %s21, 0
      %p109 = por %p107, %p108
      %p110 = scmp.ne.s32.totalorder %s102, %s104
      %p111 = scmp.eq.s32.totalorder %s26, 1
      %p112 = por %p110, %p111
      %p113 = scmp.ne.s32.totalorder %s104, %s105
      %p114 = scmp.eq.s32.totalorder %s26, 0
      %p115 = por %p113, %p114
      %p116 = scmp.ne.s32.totalorder %s104, %s105
      %p117 = scmp.eq.s32.totalorder %s27, 1
      %p118 = por %p116, %p117
      %p120 = scmp.ne.s32.totalorder %s105, %s119
      %p121 = scmp.eq.s32.totalorder %s27, 0
      %p122 = por %p120, %p121
      %s124 = sadd.s32 %s123, 1
      %p127 = scmp.eq.s32.totalorder %s21, 1
      %p128 = scmp.ne.s32.totalorder %s123, %s125
      %p129 = scmp.eq.s32.totalorder %s21, 0
      %p130 = por %p128, %p129
      %p131 = scmp.ne.s32.totalorder %s123, %s125
      %p132 = scmp.eq.s32.totalorder %s26, 1
      %p133 = por %p131, %p132
      %p134 = scmp.ne.s32.totalorder %s125, %s126
      %p135 = scmp.eq.s32.totalorder %s26, 0
      %p136 = por %p134, %p135
      %p137 = scmp.ne.s32.totalorder %s125, %s126
      %p138 = scmp.eq.s32.totalorder %s27, 1
      %p139 = por %p137, %p138
      %p141 = scmp.ne.s32.totalorder %s126, %s140
      %p142 = scmp.eq.s32.totalorder %s27, 0
      %p143 = por %p141, %p142
      %s145 = sadd.s32 %s144, 1
      %p148 = scmp.eq.s32.totalorder %s21, 1
      %p149 = scmp.ne.s32.totalorder %s144, %s146
      %p150 = scmp.eq.s32.totalorder %s21, 0
      %p151 = por %p149, %p150
      %p152 = scmp.ne.s32.totalorder %s144, %s146
      %p153 = scmp.eq.s32.totalorder %s26, 1
      %p154 = por %p152, %p153
      %p155 = scmp.ne.s32.totalorder %s146, %s147
      %p156 = scmp.eq.s32.totalorder %s26, 0
      %p157 = por %p155, %p156
      %p158 = scmp.ne.s32.totalorder %s146, %s147
      %p159 = scmp.eq.s32.totalorder %s27, 1
      %p160 = por %p158, %p159
      %p162 = scmp.ne.s32.totalorder %s147, %s161
      %p163 = scmp.eq.s32.totalorder %s27, 0
      %p164 = por %p162, %p163
      %s166 = sadd.s32 %s165, 1
      %p169 = scmp.eq.s32.totalorder %s21, 1
      %p170 = scmp.ne.s32.totalorder %s165, %s167
      %p171 = scmp.eq.s32.totalorder %s21, 0
      %p172 = por %p170, %p171
      %p173 = scmp.ne.s32.totalorder %s165, %s167
      %p174 = scmp.eq.s32.totalorder %s26, 1
      %p175 = por %p173, %p174
      %p176 = scmp.ne.s32.totalorder %s167, %s168
      %p177 = scmp.eq.s32.totalorder %s26, 0
      %p178 = por %p176, %p177
      %p179 = scmp.ne.s32.totalorder %s167, %s168
      %p180 = scmp.eq.s32.totalorder %s27, 1
      %p181 = por %p179, %p180
      %p183 = scmp.ne.s32.totalorder %s168, %s182
      %p184 = scmp.eq.s32.totalorder %s27, 0
      %p185 = por %p183, %p184
      %s187 = sadd.s32 %s186, 1
      %p190 = scmp.eq.s32.totalorder %s21, 1
      %p191 = scmp.ne.s32.totalorder %s186, %s188
      %p192 = scmp.eq.s32.totalorder %s21, 0
      %p193 = por %p191, %p192
      %p194 = scmp.ne.s32.totalorder %s186, %s188
      %p195 = scmp.eq.s32.totalorder %s26, 1
      %p196 = por %p194, %p195
      %p197 = scmp.ne.s32.totalorder %s188, %s189
      %p198 = scmp.eq.s32.totalorder %s26, 0
      %p199 = por %p197, %p198
      %p200 = scmp.ne.s32.totalorder %s188, %s189
      %p201 = scmp.eq.s32.totalorder %s27, 1
      %p202 = por %p200, %p201
      %p204 = scmp.ne.s32.totalorder %s189, %s203
      %p205 = scmp.eq.s32.totalorder %s27, 0
      %p206 = por %p204, %p205
      %s208 = sadd.s32 %s207, 1
      %p211 = scmp.eq.s32.totalorder %s21, 1
      %p212 = scmp.ne.s32.totalorder %s207, %s209
      %p213 = scmp.eq.s32.totalorder %s21, 0
      %p214 = por %p212, %p213
      %p215 = scmp.ne.s32.totalorder %s207, %s209
      %p216 = scmp.eq.s32.totalorder %s26, 1
      %p217 = por %p215, %p216
      %p218 = scmp.ne.s32.totalorder %s209, %s210
      %p219 = scmp.eq.s32.totalorder %s26, 0
      %p220 = por %p218, %p219
      %p221 = scmp.ne.s32.totalorder %s209, %s210
      %p222 = scmp.eq.s32.totalorder %s27, 1
      %p223 = por %p221, %p222
      %p225 = scmp.ne.s32.totalorder %s210, %s224
      %p226 = scmp.eq.s32.totalorder %s27, 0
      %p227 = por %p225, %p226
      %s229 = sadd.s32 %s228, 1
      %p232 = scmp.eq.s32.totalorder %s21, 1
      %p233 = scmp.ne.s32.totalorder %s228, %s230
      %p234 = scmp.eq.s32.totalorder %s21, 0
      %p235 = por %p233, %p234
      %p236 = scmp.ne.s32.totalorder %s228, %s230
      %p237 = scmp.eq.s32.totalorder %s26, 1
      %p238 = por %p236, %p237
      %p239 = scmp.ne.s32.totalorder %s230, %s231
      %p240 = scmp.eq.s32.totalorder %s26, 0
      %p241 = por %p239, %p240
      %p242 = scmp.ne.s32.totalorder %s230, %s231
      %p243 = scmp.eq.s32.totalorder %s27, 1
      %p244 = por %p242, %p243
      %p246 = scmp.ne.s32.totalorder %s231, %s245
      %p247 = scmp.eq.s32.totalorder %s27, 0
      %p248 = por %p246, %p247
      %s250 = sadd.s32 %s249, 1
      %p253 = scmp.eq.s32.totalorder %s21, 1
      %p254 = scmp.ne.s32.totalorder %s249, %s251
      %p255 = scmp.eq.s32.totalorder %s21, 0
      %p256 = por %p254, %p255
      %p257 = scmp.ne.s32.totalorder %s249, %s251
      %p258 = scmp.eq.s32.totalorder %s26, 1
      %p259 = por %p257, %p258
      %p260 = scmp.ne.s32.totalorder %s251, %s252
      %p261 = scmp.eq.s32.totalorder %s26, 0
      %p262 = por %p260, %p261
      %p263 = scmp.ne.s32.totalorder %s251, %s252
      %p264 = scmp.eq.s32.totalorder %s27, 1
      %p265 = por %p263, %p264
      %p267 = scmp.ne.s32.totalorder %s252, %s266
      %p268 = scmp.eq.s32.totalorder %s27, 0
      %p269 = por %p267, %p268
      %s271 = sadd.s32 %s270, 1
      %p274 = scmp.eq.s32.totalorder %s21, 1
      %p275 = scmp.ne.s32.totalorder %s270, %s272
      %p276 = scmp.eq.s32.totalorder %s21, 0
      %p277 = por %p275, %p276
      %p278 = scmp.ne.s32.totalorder %s270, %s272
      %p279 = scmp.eq.s32.totalorder %s26, 1
      %p280 = por %p278, %p279
      %p281 = scmp.ne.s32.totalorder %s272, %s273
      %p282 = scmp.eq.s32.totalorder %s26, 0
      %p283 = por %p281, %p282
      %p284 = scmp.ne.s32.totalorder %s272, %s273
      %p285 = scmp.eq.s32.totalorder %s27, 1
      %p286 = por %p284, %p285
      %p288 = scmp.ne.s32.totalorder %s273, %s287
      %p289 = scmp.eq.s32.totalorder %s27, 0
      %p290 = por %p288, %p289
      %s291 = ssub.s32 %s21, %s28
      %p292 = scmp.eq.s32.totalorder %s291, 0
      %s294 = sadd.s32 %s293, 1
      %s295 = scalar_select %p292, %s293, %s294
      %p298 = pneg %p292
      %p299 = scmp.eq.s32.totalorder %s21, 1
      %p300 = por %p298, %p299
      %p301 = scmp.ne.s32.totalorder %s293, %s296
      %p302 = scmp.eq.s32.totalorder %s21, 0
      %p303 = por %p301, %p302
      %p304 = scmp.ne.s32.totalorder %s293, %s296
      %p305 = scmp.eq.s32.totalorder %s26, 1
      %p306 = por %p304, %p305
      %p307 = scmp.ne.s32.totalorder %s296, %s297
      %p308 = scmp.eq.s32.totalorder %s26, 0
      %p309 = por %p307, %p308
      %p310 = scmp.ne.s32.totalorder %s296, %s297
      %p311 = scmp.eq.s32.totalorder %s27, 1
      %p312 = por %p310, %p311
      %p314 = scmp.ne.s32.totalorder %s297, %s313
      %p315 = scmp.eq.s32.totalorder %s27, 0
      %p316 = por %p314, %p315
      %p317 = scmp.le.s32.totalorder 1, %s21
      %p318 = scmp.lt.s32.totalorder %s21, 3
      %p319 = pnand %p317, %p318
      %p320 = pneg %p319
      // Predicated region
      $region9: #{tpu_custom_call.1} parent=5 // pred_check
        _
      $region10: #{tpu_custom_call.1} parent=5 // pred_check_branch
        %322 = sbr.rel (%p319) target = $region12
      $region11: #{tpu_custom_call.1} parent=5 // pred_region
        %s323 = ssub.s32 %s21, 1
        // Predicated region
        $region13: #{tpu_custom_call.1} parent=11 // pred_check
          %p324 = pneg %p94
        $region14: #{tpu_custom_call.1} parent=11 // pred_check_branch
          %326 = sbr.rel (%p324) target = $region16
        $region15: #{tpu_custom_call.1} parent=11 // pred_region
          _
        $region16: #{tpu_custom_call.1} parent=11 // pred_fallthru
          _
        // Predicated region
        $region17: #{tpu_custom_call.1} parent=11 // pred_check
          %p327 = pneg %p115
        $region18: #{tpu_custom_call.1} parent=11 // pred_check_branch
          %329 = sbr.rel (%p327) target = $region20
        $region19: #{tpu_custom_call.1} parent=11 // pred_region
          _
        $region20: #{tpu_custom_call.1} parent=11 // pred_fallthru
          _
        // Predicated region
        $region21: #{tpu_custom_call.1} parent=11 // pred_check
          %p330 = pneg %p136
        $region22: #{tpu_custom_call.1} parent=11 // pred_check_branch
          %332 = sbr.rel (%p330) target = $region24
        $region23: #{tpu_custom_call.1} parent=11 // pred_region
          _
        $region24: #{tpu_custom_call.1} parent=11 // pred_fallthru
          _
        // Predicated region
        $region25: #{tpu_custom_call.1} parent=11 // pred_check
          %p333 = pneg %p157
        $region26: #{tpu_custom_call.1} parent=11 // pred_check_branch
          %335 = sbr.rel (%p333) target = $region28
        $region27: #{tpu_custom_call.1} parent=11 // pred_region
          _
        $region28: #{tpu_custom_call.1} parent=11 // pred_fallthru
          _
        // Predicated region
        $region29: #{tpu_custom_call.1} parent=11 // pred_check
          %p336 = pneg %p178
        $region30: #{tpu_custom_call.1} parent=11 // pred_check_branch
          %338 = sbr.rel (%p336) target = $region32
        $region31: #{tpu_custom_call.1} parent=11 // pred_region
          _
        $region32: #{tpu_custom_call.1} parent=11 // pred_fallthru
          _
        // Predicated region
        $region33: #{tpu_custom_call.1} parent=11 // pred_check
          %p339 = pneg %p199
        $region34: #{tpu_custom_call.1} parent=11 // pred_check_branch
          %341 = sbr.rel (%p339) target = $region36
        $region35: #{tpu_custom_call.1} parent=11 // pred_region
          _
        $region36: #{tpu_custom_call.1} parent=11 // pred_fallthru
          _
        // Predicated region
        $region37: #{tpu_custom_call.1} parent=11 // pred_check
          %p342 = pneg %p220
        $region38: #{tpu_custom_call.1} parent=11 // pred_check_branch
          %344 = sbr.rel (%p342) target = $region40
        $region39: #{tpu_custom_call.1} parent=11 // pred_region
          _
        $region40: #{tpu_custom_call.1} parent=11 // pred_fallthru
          _
        // Predicated region
        $region41: #{tpu_custom_call.1} parent=11 // pred_check
          %p345 = pneg %p241
        $region42: #{tpu_custom_call.1} parent=11 // pred_check_branch
          %347 = sbr.rel (%p345) target = $region44
        $region43: #{tpu_custom_call.1} parent=11 // pred_region
          _
        $region44: #{tpu_custom_call.1} parent=11 // pred_fallthru
          _
        // Predicated region
        $region45: #{tpu_custom_call.1} parent=11 // pred_check
          %p348 = pneg %p262
        $region46: #{tpu_custom_call.1} parent=11 // pred_check_branch
          %350 = sbr.rel (%p348) target = $region48
        $region47: #{tpu_custom_call.1} parent=11 // pred_region
          _
        $region48: #{tpu_custom_call.1} parent=11 // pred_fallthru
          _
        // Predicated region
        $region49: #{tpu_custom_call.1} parent=11 // pred_check
          %p351 = pneg %p283
        $region50: #{tpu_custom_call.1} parent=11 // pred_check_branch
          %353 = sbr.rel (%p351) target = $region52
        $region51: #{tpu_custom_call.1} parent=11 // pred_region
          _
        $region52: #{tpu_custom_call.1} parent=11 // pred_fallthru
          _
      $region12: #{tpu_custom_call.1} parent=5 // pred_fallthru
        _
      %p354 = scmp.lt.s32.totalorder %s21, 2
      // Predicated region
      $region53: #{tpu_custom_call.1} parent=5 // pred_check
        %p355 = pneg %p354
      $region54: #{tpu_custom_call.1} parent=5 // pred_check_branch
        %357 = sbr.rel (%p355) target = $region56
      $region55: #{tpu_custom_call.1} parent=5 // pred_region
        // Predicated region
        $region57: #{tpu_custom_call.1} parent=55 // pred_check
          %p358 = pneg %p41
        $region58: #{tpu_custom_call.1} parent=55 // pred_check_branch
          %360 = sbr.rel (%p358) target = $region60
        $region59: #{tpu_custom_call.1} parent=55 // pred_region
          %p361 = scmp.lt.s32.totalorder %s21, 1
          %s362 = scalar_select %p361, %s21, 1
          %s363 = smul.addr %s362, 2
          %s364 = smul.addr %s363, 4
          %s365 = scalar_lea.vmem %s0, %s364
        $region60: #{tpu_custom_call.1} parent=55 // pred_fallthru
          _
        // Predicated region
        $region61: #{tpu_custom_call.1} parent=55 // pred_check
          %p366 = pneg %p67
        $region62: #{tpu_custom_call.1} parent=55 // pred_check_branch
          %368 = sbr.rel (%p366) target = $region64
        $region63: #{tpu_custom_call.1} parent=55 // pred_region
          %p369 = scmp.lt.s32.totalorder %s21, 1
          %s370 = scalar_select %p369, %s21, 1
          %s371 = smul.addr %s370, 2
          %s372 = smul.addr %s371, 8
          %s373 = scalar_lea.vmem %s1, %s372
        $region64: #{tpu_custom_call.1} parent=55 // pred_fallthru
          _
      $region56: #{tpu_custom_call.1} parent=5 // pred_fallthru
        _
      %p374 = scmp.le.s32.totalorder 1, %s21
      %p375 = scmp.lt.s32.totalorder %s21, 3
      %p376 = pnand %p374, %p375
      %p377 = pneg %p376
      // Predicated region
      $region65: #{tpu_custom_call.1} parent=5 // pred_check
        _
      $region66: #{tpu_custom_call.1} parent=5 // pred_check_branch
        %379 = sbr.rel (%p376) target = $region68
      $region67: #{tpu_custom_call.1} parent=5 // pred_region
        %s380 = ssub.s32 %s21, 1
        %p381 = scmp.lt.s32.totalorder %s26, 1
        %s382 = scalar_select %p381, %s26, 1
        %s383 = smul.addr %s382, 2
        %s384 = smul.addr %s383, 4
        %s385 = scalar_lea.vmem %s0, %s384
        %p386 = pneg %p47
        %p387 = pneg %p44
        %p388 = scmp.lt.s32.totalorder %s26, 1
        %s389 = scalar_select %p388, %s26, 1
        %s390 = smul.addr %s389, 2
        %s391 = smul.addr %s390, 8
        %s392 = scalar_lea.vmem %s1, %s391
        %p393 = pneg %p73
        %p394 = pneg %p70
        %p395 = pneg %p94
        %p396 = pneg %p91
        %p397 = pneg %p115
        %p398 = pneg %p112
        %p399 = pneg %p136
        %p400 = pneg %p133
        %p401 = pneg %p157
        %p402 = pneg %p154
        %p403 = pneg %p178
        %p404 = pneg %p175
        %p405 = pneg %p199
        %p406 = pneg %p196
        %p407 = pneg %p220
        %p408 = pneg %p217
        %p409 = pneg %p241
        %p410 = pneg %p238
        %p411 = pneg %p262
        %p412 = pneg %p259
        %p413 = pneg %p283
        %p414 = pneg %p280
        %p415 = pneg %p309
        %p416 = pneg %p306
        %s417 = sand.u32 %s296, 1
        %s418 = scalar_lea.sflag [#allocation4], %s417
        %s419 = sand.u32 %s296, 1
        %s420 = smul.addr %s419, 16
        %s421 = scalar_lea.vmem [#allocation3], %s420
        %p422 = scmp.lt.s32.totalorder %s26, 1
        %s423 = scalar_select %p422, %s26, 1
        %s424 = smul.addr %s423, 2
        %s425 = smul.addr %s424, 4
        %s426 = scalar_lea.vmem %s0, %s425
        %p427 = scmp.lt.s32.totalorder %s26, 1
        %s428 = scalar_select %p427, %s26, 1
        %s429 = smul.addr %s428, 2
        %s430 = smul.addr %s429, 8
        %s431 = scalar_lea.vmem %s1, %s430
        %v433 = vlaneseq
        %v434 = vand.u32 %v433, 127
        %v435 = vadd.s32 %v434, 128
        %v436 = vand.u32 %v434, 15
        %v437 = vand.u32 %v435, 15
        %vm438 = vcmp.lt.s32.totalorder %v436, 1
        %vm439 = vcmp.lt.s32.totalorder %v437, 1
        %vm440 = vcmp.ge.s32.totalorder %v436, 15
        %vm441 = vcmp.ge.s32.totalorder %v437, 15
        %v442 = vld [vmem:[%s426] sm:$0xff]
        %v443 = vld [vmem:[%s3] sm:$0xf]
        %v444 = vld [vmem:[%s4] sm:$0xf]
        %v445 = vld [vmem:[%s2] sm:$0xf]
        %447 = vst [vmem:[#allocation1] ss:$2 sm:$0xff] %v442
        %v448 = vld.sshfl [vmem:[#allocation1] sm:$0xff pattern:$0x75316420]
        %v449 = vld.sshfl [vmem:[#allocation1 + $0x8] sm:$0xff pattern:$0x75316420]
        %vm452 = vcmask 1043456
        %v453 = vsel %vm452, %v448, 0.0
        %v454 = vsel %vm452, %v449, 0.0
        %v455 = vadd.f32 %v453, %v454
        %456 = vadd.xlane.f32.xlu0 %v455
        %v457 = vpop.xlane.xlu0 %456
        %vm458 = vcmask 31744
        %v460 = vsel %vm458, %v445, 0
        %v463 = vsel %vm452, %v457, 0
        %465 = vmatpush.msra.mxu0 0.0
        %466 = vmatpush.msra.mxu0 0.0
        %467 = vmatpush.msra.mxu0 0.0
        %468 = vmatpush.msra.mxu0 0.0
        %469 = vmatpush.msra.mxu0 0.0
        %470 = vmatpush.msra.mxu0 0.0
        %471 = vmatpush.msra.mxu0 0.0
        %472 = vmatpush.msra.mxu0 0.0
        %473 = vmatpush.msra.mxu0 0.0
        %474 = vmatpush.msra.mxu0 0.0
        %475 = vmatpush.msra.mxu0 0.0
        %476 = vmatpush.msra.mxu0 0.0
        %477 = vmatpush.msra.mxu0 0.0
        %478 = vmatpush.msra.mxu0 0.0
        %479 = vmatpush.msra.mxu0 0.0
        %v480 = vand.u32 %v463, 4294901760
        %481 = vmatpush.msra.mxu0 %v480
        %v482 = vand.u32 %v460, 4294901760
        %v483 = vsub.f32 %v460, %v482
        %v484 = vand.u32 %v483, 4294901760
        %v485 = vsub.f32 %v483, %v484
        %v486 = vand.u32 %v485, 4294901760
        %487 = vmatmul.f32.gmra.mxu0 %v486
        %v488 = vpop.f32.mrf.mxu0
        %v489 = vadd.f32 0.0, %v488
        %490 = vdwg.mxu0
        %491 = vmatpush.msra.mxu0 0.0
        %492 = vmatpush.msra.mxu0 0.0
        %493 = vmatpush.msra.mxu0 0.0
        %494 = vmatpush.msra.mxu0 0.0
        %495 = vmatpush.msra.mxu0 0.0
        %496 = vmatpush.msra.mxu0 0.0
        %497 = vmatpush.msra.mxu0 0.0
        %498 = vmatpush.msra.mxu0 0.0
        %499 = vmatpush.msra.mxu0 0.0
        %500 = vmatpush.msra.mxu0 0.0
        %501 = vmatpush.msra.mxu0 0.0
        %502 = vmatpush.msra.mxu0 0.0
        %503 = vmatpush.msra.mxu0 0.0
        %504 = vmatpush.msra.mxu0 0.0
        %505 = vmatpush.msra.mxu0 0.0
        %v506 = vand.u32 %v463, 4294901760
        %v507 = vsub.f32 %v463, %v506
        %v508 = vand.u32 %v507, 4294901760
        %v509 = vsub.f32 %v507, %v508
        %v510 = vand.u32 %v509, 4294901760
        %511 = vmatpush.msra.mxu0 %v510
        %v512 = vand.u32 %v460, 4294901760
        %513 = vmatmul.f32.gmra.mxu0 %v512
        %v514 = vpop.f32.mrf.mxu0
        %v515 = vadd.f32 %v489, %v514
        %516 = vdwg.mxu0
        %517 = vmatpush.msra.mxu0 0.0
        %518 = vmatpush.msra.mxu0 0.0
        %519 = vmatpush.msra.mxu0 0.0
        %520 = vmatpush.msra.mxu0 0.0
        %521 = vmatpush.msra.mxu0 0.0
        %522 = vmatpush.msra.mxu0 0.0
        %523 = vmatpush.msra.mxu0 0.0
        %524 = vmatpush.msra.mxu0 0.0
        %525 = vmatpush.msra.mxu0 0.0
        %526 = vmatpush.msra.mxu0 0.0
        %527 = vmatpush.msra.mxu0 0.0
        %528 = vmatpush.msra.mxu0 0.0
        %529 = vmatpush.msra.mxu0 0.0
        %530 = vmatpush.msra.mxu0 0.0
        %531 = vmatpush.msra.mxu0 0.0
        %v532 = vand.u32 %v463, 4294901760
        %v533 = vsub.f32 %v463, %v532
        %534 = vmatpush.msra.mxu0 %v533
        %v535 = vand.u32 %v460, 4294901760
        %v536 = vsub.f32 %v460, %v535
        %537 = vmatmul.f32.gmra.mxu0 %v536
        %v538 = vpop.f32.mrf.mxu0
        %v539 = vadd.f32 %v515, %v538
        %540 = vdwg.mxu0
        %541 = vmatpush.msra.mxu0 0.0
        %542 = vmatpush.msra.mxu0 0.0
        %543 = vmatpush.msra.mxu0 0.0
        %544 = vmatpush.msra.mxu0 0.0
        %545 = vmatpush.msra.mxu0 0.0
        %546 = vmatpush.msra.mxu0 0.0
        %547 = vmatpush.msra.mxu0 0.0
        %548 = vmatpush.msra.mxu0 0.0
        %549 = vmatpush.msra.mxu0 0.0
        %550 = vmatpush.msra.mxu0 0.0
        %551 = vmatpush.msra.mxu0 0.0
        %552 = vmatpush.msra.mxu0 0.0
        %553 = vmatpush.msra.mxu0 0.0
        %554 = vmatpush.msra.mxu0 0.0
        %555 = vmatpush.msra.mxu0 0.0
        %v556 = vand.u32 %v463, 4294901760
        %557 = vmatpush.msra.mxu0 %v556
        %v558 = vand.u32 %v460, 4294901760
        %v559 = vsub.f32 %v460, %v558
        %v560 = vand.u32 %v559, 4294901760
        %561 = vmatmul.f32.gmra.mxu0 %v560
        %v562 = vpop.f32.mrf.mxu0
        %v563 = vadd.f32 %v539, %v562
        %564 = vdwg.mxu0
        %565 = vmatpush.msra.mxu0 0.0
        %566 = vmatpush.msra.mxu0 0.0
        %567 = vmatpush.msra.mxu0 0.0
        %568 = vmatpush.msra.mxu0 0.0
        %569 = vmatpush.msra.mxu0 0.0
        %570 = vmatpush.msra.mxu0 0.0
        %571 = vmatpush.msra.mxu0 0.0
        %572 = vmatpush.msra.mxu0 0.0
        %573 = vmatpush.msra.mxu0 0.0
        %574 = vmatpush.msra.mxu0 0.0
        %575 = vmatpush.msra.mxu0 0.0
        %576 = vmatpush.msra.mxu0 0.0
        %577 = vmatpush.msra.mxu0 0.0
        %578 = vmatpush.msra.mxu0 0.0
        %579 = vmatpush.msra.mxu0 0.0
        %v580 = vand.u32 %v463, 4294901760
        %v581 = vsub.f32 %v463, %v580
        %v582 = vand.u32 %v581, 4294901760
        %583 = vmatpush.msra.mxu0 %v582
        %v584 = vand.u32 %v460, 4294901760
        %585 = vmatmul.f32.gmra.mxu0 %v584
        %v586 = vpop.f32.mrf.mxu0
        %v587 = vadd.f32 %v563, %v586
        %588 = vdwg.mxu0
        %589 = vmatpush.msra.mxu0 0.0
        %590 = vmatpush.msra.mxu0 0.0
        %591 = vmatpush.msra.mxu0 0.0
        %592 = vmatpush.msra.mxu0 0.0
        %593 = vmatpush.msra.mxu0 0.0
        %594 = vmatpush.msra.mxu0 0.0
        %595 = vmatpush.msra.mxu0 0.0
        %596 = vmatpush.msra.mxu0 0.0
        %597 = vmatpush.msra.mxu0 0.0
        %598 = vmatpush.msra.mxu0 0.0
        %599 = vmatpush.msra.mxu0 0.0
        %600 = vmatpush.msra.mxu0 0.0
        %601 = vmatpush.msra.mxu0 0.0
        %602 = vmatpush.msra.mxu0 0.0
        %603 = vmatpush.msra.mxu0 0.0
        %v604 = vand.u32 %v463, 4294901760
        %605 = vmatpush.msra.mxu0 %v604
        %v606 = vand.u32 %v460, 4294901760
        %607 = vmatmul.f32.gmra.mxu0 %v606
        %v608 = vpop.f32.mrf.mxu0
        %v609 = vadd.f32 %v587, %v608
        %610 = vdwg.mxu0
        %612 = vset.pattern.permute.xlu0 0
        %613 = vperm.xlu0 %612, %v609
        %v614 = vpop.permute.xlu0 %613
        %v616 = vunpack.c.l.s4 839922192
        %v617 = vunpack.c.0.s8 %v616
        %v618 = vperm.slane %v614, %v617
        %v620 = vsub.f32 %v442, %v618
        %v621 = vmul.f32 %v620, %v620
        %623 = vst [vmem:[#allocation1] ss:$2 sm:$0xff] %v621
        %v624 = vld.sshfl [vmem:[#allocation1] sm:$0xff pattern:$0x75316420]
        %v625 = vld.sshfl [vmem:[#allocation1 + $0x8] sm:$0xff pattern:$0x75316420]
        %v628 = vsel %vm452, %v624, 0.0
        %v629 = vsel %vm452, %v625, 0.0
        %v630 = vadd.f32 %v628, %v629
        %631 = vadd.xlane.f32.xlu0 %v630
        %v632 = vpop.xlane.xlu0 %631
        %v634 = vsel %vm452, %v632, 0
        %636 = vmatpush.msra.mxu0 0.0
        %637 = vmatpush.msra.mxu0 0.0
        %638 = vmatpush.msra.mxu0 0.0
        %639 = vmatpush.msra.mxu0 0.0
        %640 = vmatpush.msra.mxu0 0.0
        %641 = vmatpush.msra.mxu0 0.0
        %642 = vmatpush.msra.mxu0 0.0
        %643 = vmatpush.msra.mxu0 0.0
        %644 = vmatpush.msra.mxu0 0.0
        %645 = vmatpush.msra.mxu0 0.0
        %646 = vmatpush.msra.mxu0 0.0
        %647 = vmatpush.msra.mxu0 0.0
        %648 = vmatpush.msra.mxu0 0.0
        %649 = vmatpush.msra.mxu0 0.0
        %650 = vmatpush.msra.mxu0 0.0
        %v651 = vand.u32 %v634, 4294901760
        %652 = vmatpush.msra.mxu0 %v651
        %v653 = vand.u32 %v460, 4294901760
        %v654 = vsub.f32 %v460, %v653
        %v655 = vand.u32 %v654, 4294901760
        %v656 = vsub.f32 %v654, %v655
        %v657 = vand.u32 %v656, 4294901760
        %658 = vmatmul.f32.gmra.mxu0 %v657
        %v659 = vpop.f32.mrf.mxu0
        %v660 = vadd.f32 1e-05, %v659
        %661 = vdwg.mxu0
        %662 = vmatpush.msra.mxu0 0.0
        %663 = vmatpush.msra.mxu0 0.0
        %664 = vmatpush.msra.mxu0 0.0
        %665 = vmatpush.msra.mxu0 0.0
        %666 = vmatpush.msra.mxu0 0.0
        %667 = vmatpush.msra.mxu0 0.0
        %668 = vmatpush.msra.mxu0 0.0
        %669 = vmatpush.msra.mxu0 0.0
        %670 = vmatpush.msra.mxu0 0.0
        %671 = vmatpush.msra.mxu0 0.0
        %672 = vmatpush.msra.mxu0 0.0
        %673 = vmatpush.msra.mxu0 0.0
        %674 = vmatpush.msra.mxu0 0.0
        %675 = vmatpush.msra.mxu0 0.0
        %676 = vmatpush.msra.mxu0 0.0
        %v677 = vand.u32 %v634, 4294901760
        %v678 = vsub.f32 %v634, %v677
        %v679 = vand.u32 %v678, 4294901760
        %v680 = vsub.f32 %v678, %v679
        %v681 = vand.u32 %v680, 4294901760
        %682 = vmatpush.msra.mxu0 %v681
        %v683 = vand.u32 %v460, 4294901760
        %684 = vmatmul.f32.gmra.mxu0 %v683
        %v685 = vpop.f32.mrf.mxu0
        %v686 = vadd.f32 %v660, %v685
        %687 = vdwg.mxu0
        %688 = vmatpush.msra.mxu0 0.0
        %689 = vmatpush.msra.mxu0 0.0
        %690 = vmatpush.msra.mxu0 0.0
        %691 = vmatpush.msra.mxu0 0.0
        %692 = vmatpush.msra.mxu0 0.0
        %693 = vmatpush.msra.mxu0 0.0
        %694 = vmatpush.msra.mxu0 0.0
        %695 = vmatpush.msra.mxu0 0.0
        %696 = vmatpush.msra.mxu0 0.0
        %697 = vmatpush.msra.mxu0 0.0
        %698 = vmatpush.msra.mxu0 0.0
        %699 = vmatpush.msra.mxu0 0.0
        %700 = vmatpush.msra.mxu0 0.0
        %701 = vmatpush.msra.mxu0 0.0
        %702 = vmatpush.msra.mxu0 0.0
        %v703 = vand.u32 %v634, 4294901760
        %v704 = vsub.f32 %v634, %v703
        %705 = vmatpush.msra.mxu0 %v704
        %v706 = vand.u32 %v460, 4294901760
        %v707 = vsub.f32 %v460, %v706
        %708 = vmatmul.f32.gmra.mxu0 %v707
        %v709 = vpop.f32.mrf.mxu0
        %v710 = vadd.f32 %v686, %v709
        %711 = vdwg.mxu0
        %712 = vmatpush.msra.mxu0 0.0
        %713 = vmatpush.msra.mxu0 0.0
        %714 = vmatpush.msra.mxu0 0.0
        %715 = vmatpush.msra.mxu0 0.0
        %716 = vmatpush.msra.mxu0 0.0
        %717 = vmatpush.msra.mxu0 0.0
        %718 = vmatpush.msra.mxu0 0.0
        %719 = vmatpush.msra.mxu0 0.0
        %720 = vmatpush.msra.mxu0 0.0
        %721 = vmatpush.msra.mxu0 0.0
        %722 = vmatpush.msra.mxu0 0.0
        %723 = vmatpush.msra.mxu0 0.0
        %724 = vmatpush.msra.mxu0 0.0
        %725 = vmatpush.msra.mxu0 0.0
        %726 = vmatpush.msra.mxu0 0.0
        %v727 = vand.u32 %v634, 4294901760
        %728 = vmatpush.msra.mxu0 %v727
        %v729 = vand.u32 %v460, 4294901760
        %v730 = vsub.f32 %v460, %v729
        %v731 = vand.u32 %v730, 4294901760
        %732 = vmatmul.f32.gmra.mxu0 %v731
        %v733 = vpop.f32.mrf.mxu0
        %v734 = vadd.f32 %v710, %v733
        %735 = vdwg.mxu0
        %736 = vmatpush.msra.mxu0 0.0
        %737 = vmatpush.msra.mxu0 0.0
        %738 = vmatpush.msra.mxu0 0.0
        %739 = vmatpush.msra.mxu0 0.0
        %740 = vmatpush.msra.mxu0 0.0
        %741 = vmatpush.msra.mxu0 0.0
        %742 = vmatpush.msra.mxu0 0.0
        %743 = vmatpush.msra.mxu0 0.0
        %744 = vmatpush.msra.mxu0 0.0
        %745 = vmatpush.msra.mxu0 0.0
        %746 = vmatpush.msra.mxu0 0.0
        %747 = vmatpush.msra.mxu0 0.0
        %748 = vmatpush.msra.mxu0 0.0
        %749 = vmatpush.msra.mxu0 0.0
        %750 = vmatpush.msra.mxu0 0.0
        %v751 = vand.u32 %v634, 4294901760
        %v752 = vsub.f32 %v634, %v751
        %v753 = vand.u32 %v752, 4294901760
        %754 = vmatpush.msra.mxu0 %v753
        %v755 = vand.u32 %v460, 4294901760
        %756 = vmatmul.f32.gmra.mxu0 %v755
        %v757 = vpop.f32.mrf.mxu0
        %v758 = vadd.f32 %v734, %v757
        %759 = vdwg.mxu0
        %760 = vmatpush.msra.mxu0 0.0
        %761 = vmatpush.msra.mxu0 0.0
        %762 = vmatpush.msra.mxu0 0.0
        %763 = vmatpush.msra.mxu0 0.0
        %764 = vmatpush.msra.mxu0 0.0
        %765 = vmatpush.msra.mxu0 0.0
        %766 = vmatpush.msra.mxu0 0.0
        %767 = vmatpush.msra.mxu0 0.0
        %768 = vmatpush.msra.mxu0 0.0
        %769 = vmatpush.msra.mxu0 0.0
        %770 = vmatpush.msra.mxu0 0.0
        %771 = vmatpush.msra.mxu0 0.0
        %772 = vmatpush.msra.mxu0 0.0
        %773 = vmatpush.msra.mxu0 0.0
        %774 = vmatpush.msra.mxu0 0.0
        %v775 = vand.u32 %v634, 4294901760
        %776 = vmatpush.msra.mxu0 %v775
        %v777 = vand.u32 %v460, 4294901760
        %778 = vmatmul.f32.gmra.mxu0 %v777
        %v779 = vpop.f32.mrf.mxu0
        %v780 = vadd.f32 %v758, %v779
        %781 = vdwg.mxu0
        %v782 = vrsqrt.pop %v780
        %v783 = vmul.f32 %v782, %v780
        %v784 = vmul.f32 %v783, %v782
        %v785 = vmul.f32 0.5, %v784
        %v786 = vsub.f32 1.5, %v785
        %v787 = vmul.f32 %v782, %v786
        %vm788 = vweird.f32 %v780
        %vm789 = vweird.f32 %v782
        %vm790 = vmor %vm788, %vm789
        %v791 = vsel %vm790, %v782, %v787
        %793 = vset.pattern.permute.xlu0 0
        %794 = vperm.xlu0 %793, %v791
        %v795 = vpop.permute.xlu0 %794
        %v797 = vunpack.c.l.s4 839922192
        %v798 = vunpack.c.0.s8 %v797
        %v799 = vperm.slane %v795, %v798
        %v801 = vmul.f32 %v620, %v799
        %803 = vset.pattern.permute.xlu0 0
        %804 = vperm.xlu0 %803, %v443
        %v805 = vpop.permute.xlu0 %804
        %v807 = vunpack.c.l.s4 839922192
        %v808 = vunpack.c.0.s8 %v807
        %v809 = vperm.slane %v805, %v808
        %v811 = vmul.f32 %v801, %v809
        %813 = vset.pattern.permute.xlu0 0
        %814 = vperm.xlu0 %813, %v444
        %v815 = vpop.permute.xlu0 %814
        %v817 = vunpack.c.l.s4 839922192
        %v818 = vunpack.c.0.s8 %v817
        %v819 = vperm.slane %v815, %v818
        %v821 = vadd.f32 %v811, %v819
        %v822 = vxor.u32 %v821, 2147483648
        %v823 = vmul.f32 %v822, 1.442695
        %v824 = vpow.pop %v823
        %v825 = vadd.f32 %v824, 1.0
        %v826 = vrcp.pop %v825
        %v827 = vmul.f32 %v825, %v826
        %v828 = vsub.f32 1.0, %v827
        %v829 = vmul.f32 %v826, %v828
        %v830 = vadd.f32 %v826, %v829
        %vm831 = vweird.f32 %v825
        %vm832 = vweird.f32 %v826
        %vm833 = vmor %vm831, %vm832
        %v834 = vsel %vm833, %v826, %v830
        %v835 = vand.u32 2147483647, %v825
        %vm836 = vcmp.eq.f32.partialorder %v835, 8.507059e+37
        %v837 = vand.u32 %v825, 2147483648
        %v838 = vor.u32 1.1754944e-38, %v837
        %v839 = vsel %vm836, %v838, %v834
        %v840 = vmul.f32 1.0, %v839
        %v841 = vmul.f32 %v821, %v840
        %843 = vst [vmem:[#allocation1] ss:$2 sm:$0xff] %v841
        %v844 = vld.sshfl [vmem:[#allocation1] sm:$0xff pattern:$0x75316420]
        %v845 = vld.sshfl [vmem:[#allocation1 + $0x8] sm:$0xff pattern:$0x75316420]
        %846 = vrot.lane.b32.xlu0 %v844, 113
        %v847 = vpop.permute.xlu0 %846
        %848 = vrot.lane.b32.xlu0 %v845, 113
        %v849 = vpop.permute.xlu0 %848
        %vm850 = vcmask 924672
        %v851 = vsel %vm850, %v847, %v849
        %854 = vst [vmem:[#allocation1] ss:$2 sm:$0xff] %v841
        %v855 = vld.sshfl [vmem:[#allocation1] sm:$0xff pattern:$0x75316420]
        %856 = vrot.lane.b32.xlu0 %v855, 113
        %v857 = vpop.permute.xlu0 %856
        %v859 = vsel %vm850, %v849, %v857
        %860 = vst [vmem:[#allocation1] ss:$2 sm:$0xff] %v841
        %v861 = vld.sshfl [vmem:[#allocation1 + $0x8] sm:$0xff pattern:$0x75316420]
        %862 = vrot.lane.b32.xlu0 %v861, 1
        %v863 = vpop.permute.xlu0 %862
        %865 = vst [vmem:[#allocation1] ss:$2 sm:$0xff] %v841
        %v866 = vld.sshfl [vmem:[#allocation1] sm:$0xff pattern:$0x75316420]
        %v867 = vld.sshfl [vmem:[#allocation1 + $0x8] sm:$0xff pattern:$0x75316420]
        %868 = vrot.lane.b32.xlu0 %v866, 1
        %v869 = vpop.permute.xlu0 %868
        %870 = vrot.lane.b32.xlu0 %v867, 1
        %v871 = vpop.permute.xlu0 %870
        %vm872 = vcmask 7168
        %v873 = vsel %vm872, %v869, %v871
        %v876 = vsel %vm872, %v863, %v869
        %v877 = vsel %vm438, 1, 0
        %v878 = vsel %vm439, 1, 0
        %vm879 = vcmp.eq.s32.totalorder %v877, 1
        %vm880 = vcmp.eq.s32.totalorder %v878, 1
        %v881 = vsel %vm879, %v851, %v876
        %v882 = vsel %vm880, %v859, %v873
        %883 = vst [vmem:[#allocation1] ss:$2 sm:$0xff] %v841
        %v884 = vld.sshfl [vmem:[#allocation1 + $0x8] sm:$0xff pattern:$0x75316420]
        %885 = vrot.lane.b32.xlu0 %v884, 15
        %v886 = vpop.permute.xlu0 %885
        %888 = vst [vmem:[#allocation1] ss:$2 sm:$0xff] %v841
        %v889 = vld.sshfl [vmem:[#allocation1] sm:$0xff pattern:$0x75316420]
        %v890 = vld.sshfl [vmem:[#allocation1 + $0x8] sm:$0xff pattern:$0x75316420]
        %891 = vrot.lane.b32.xlu0 %v889, 15
        %v892 = vpop.permute.xlu0 %891
        %893 = vrot.lane.b32.xlu0 %v890, 15
        %v894 = vpop.permute.xlu0 %893
        %vm895 = vcmask 121856
        %v896 = vsel %vm895, %v892, %v894
        %v899 = vsel %vm895, %v886, %v892
        %900 = vst [vmem:[#allocation1] ss:$2 sm:$0xff] %v841
        %v901 = vld.sshfl [vmem:[#allocation1] sm:$0xff pattern:$0x75316420]
        %v902 = vld.sshfl [vmem:[#allocation1 + $0x8] sm:$0xff pattern:$0x75316420]
        %903 = vrot.lane.b32.xlu0 %v901, 127
        %v904 = vpop.permute.xlu0 %903
        %905 = vrot.lane.b32.xlu0 %v902, 127
        %v906 = vpop.permute.xlu0 %905
        %vm907 = vcmask 1039360
        %v908 = vsel %vm907, %v904, %v906
        %911 = vst [vmem:[#allocation1] ss:$2 sm:$0xff] %v841
        %v912 = vld.sshfl [vmem:[#allocation1] sm:$0xff pattern:$0x75316420]
        %913 = vrot.lane.b32.xlu0 %v912, 127
        %v914 = vpop.permute.xlu0 %913
        %v916 = vsel %vm907, %v906, %v914
        %v917 = vsel %vm440, 1, 0
        %v918 = vsel %vm441, 1, 0
        %vm919 = vcmp.eq.s32.totalorder %v917, 1
        %vm920 = vcmp.eq.s32.totalorder %v918, 1
        %v921 = vsel %vm919, %v899, %v908
        %v922 = vsel %vm920, %v896, %v916
        %v923 = vpack.c.bf16 %v882, %v881
        %924 = vst [vmem:[#allocation2] sm:$0x33] %v923
        %925 = vst [vmem:[#allocation2] sm:$0xcc] 0
        %926 = vst [vmem:[#allocation2 + $0x8] sm:$0xff] 0
        %927 = vst [vmem:[#allocation1] ss:$2 sm:$0xff] %v841
        %v928 = vld.sshfl [vmem:[#allocation1] sm:$0xff pattern:$0x75316420]
        %v929 = vld.sshfl [vmem:[#allocation1 + $0x8] sm:$0xff pattern:$0x75316420]
        %v932 = vpack.c.bf16 %v929, %v928
        %933 = vst [vmem:[#allocation2 + $0x10] sm:$0x33] %v932
        %934 = vst [vmem:[#allocation2 + $0x10] sm:$0xcc] 0
        %935 = vst [vmem:[#allocation2 + $0x18] sm:$0xff] 0
        %v936 = vpack.c.bf16 %v922, %v921
        %937 = vst [vmem:[#allocation2 + $0x20] sm:$0x33] %v936
        %938 = vst [vmem:[#allocation2 + $0x20] sm:$0xcc] 0
        %939 = vst [vmem:[#allocation2 + $0x28] sm:$0xff] 0
        %v940 = vld [vmem:[%s6] sm:$0xff]
        %v941 = vld [vmem:[#allocation2] sm:$0xff]
        %v942 = vld [vmem:[#allocation2 + $0x8] sm:$0xff]
        %v943 = vld [vmem:[#allocation2 + $0x10] sm:$0xff]
        %v944 = vld [vmem:[#allocation2 + $0x18] sm:$0xff]
        %v945 = vld [vmem:[#allocation2 + $0x20] sm:$0xff]
        %v946 = vld [vmem:[#allocation2 + $0x28] sm:$0xff]
        %v947 = vld [vmem:[%s5] sm:$0xf]
        %v954 = vunpack.c.l.b16 %v941
        %v955 = vunpack.c.h.b16 %v941
        %v956 = vunpack.c.l.b16 %v942
        %v957 = vunpack.c.h.b16 %v942
        %v958 = vunpack.c.l.b16 %v943
        %v959 = vunpack.c.h.b16 %v943
        %v960 = vunpack.c.l.b16 %v944
        %v961 = vunpack.c.h.b16 %v944
        %v962 = vunpack.c.l.b16 %v945
        %v963 = vunpack.c.h.b16 %v945
        %v964 = vunpack.c.l.b16 %v946
        %v965 = vunpack.c.h.b16 %v946
        %v966 = vpack.c.b16 %v956, %v954
        %v967 = vpack.c.b16 %v957, %v955
        %v968 = vpack.c.b16 %v960, %v958
        %v969 = vpack.c.b16 %v961, %v959
        %v970 = vpack.c.b16 %v964, %v962
        %v971 = vpack.c.b16 %v965, %v963
        %vm978 = vcmask 392192
        %v980 = vsel %vm978, %v947, 0
        %982 = vmatpush.bf16.msra.mxu0 0
        %983 = vmatpush.bf16.msra.mxu0 0
        %984 = vmatpush.bf16.msra.mxu0 0
        %985 = vmatpush.bf16.msra.mxu0 0
        %986 = vmatpush.bf16.msra.mxu0 0
        %987 = vmatpush.bf16.msra.mxu0 %v970
        %988 = vmatpush.bf16.msra.mxu0 %v968
        %989 = vmatpush.bf16.msra.mxu0 %v966
        %990 = vmatmul.bf16.gmra.mxu0 %v980
        %v991 = vpop.f32.mrf.mxu0
        %v992 = vadd.f32 0.0, %v991
        %v993 = vpop.f32.mrf.mxu0
        %994 = vdwg.mxu0
        %995 = vmatpush.bf16.msra.mxu0 0
        %996 = vmatpush.bf16.msra.mxu0 0
        %997 = vmatpush.bf16.msra.mxu0 0
        %998 = vmatpush.bf16.msra.mxu0 0
        %999 = vmatpush.bf16.msra.mxu0 0
        %1000 = vmatpush.bf16.msra.mxu0 %v971
        %1001 = vmatpush.bf16.msra.mxu0 %v969
        %1002 = vmatpush.bf16.msra.mxu0 %v967
        %1003 = vmatmul.bf16.gmra.mxu0 %v980
        %v1004 = vpop.f32.mrf.mxu0
        %v1005 = vadd.f32 0.0, %v1004
        %v1006 = vpop.f32.mrf.mxu0
        %1007 = vdwg.mxu0
        %1009 = vrot.lane.b32.xlu0 %v1005, 16
        %v1010 = vpop.permute.xlu0 %1009
        %1013 = vrot.lane.b32.xlu0 %v992, 16
        %v1014 = vpop.permute.xlu0 %1013
        %vm1015 = vcmask 130048
        %v1016 = vsel %vm1015, %v1014, %v1010
        %v1019 = vsel %vm1015, %v1010, %v1014
        %s1020 = scalar_lea.vmem %s5, 4
        %v1021 = vld [vmem:[%s1020] sm:$0xf]
        %v1023 = vsel %vm978, %v1021, 0
        %1025 = vmatpush.bf16.msra.mxu0 0
        %1026 = vmatpush.bf16.msra.mxu0 0
        %1027 = vmatpush.bf16.msra.mxu0 0
        %1028 = vmatpush.bf16.msra.mxu0 0
        %1029 = vmatpush.bf16.msra.mxu0 0
        %1030 = vmatpush.bf16.msra.mxu0 %v970
        %1031 = vmatpush.bf16.msra.mxu0 %v968
        %1032 = vmatpush.bf16.msra.mxu0 %v966
        %1033 = vmatmul.bf16.gmra.mxu0 %v1023
        %v1034 = vpop.f32.mrf.mxu0
        %v1035 = vadd.f32 0.0, %v1034
        %v1036 = vpop.f32.mrf.mxu0
        %1037 = vdwg.mxu0
        %1038 = vmatpush.bf16.msra.mxu0 0
        %1039 = vmatpush.bf16.msra.mxu0 0
        %1040 = vmatpush.bf16.msra.mxu0 0
        %1041 = vmatpush.bf16.msra.mxu0 0
        %1042 = vmatpush.bf16.msra.mxu0 0
        %1043 = vmatpush.bf16.msra.mxu0 %v971
        %1044 = vmatpush.bf16.msra.mxu0 %v969
        %1045 = vmatpush.bf16.msra.mxu0 %v967
        %1046 = vmatmul.bf16.gmra.mxu0 %v1023
        %v1047 = vpop.f32.mrf.mxu0
        %v1048 = vadd.f32 0.0, %v1047
        %v1049 = vpop.f32.mrf.mxu0
        %1050 = vdwg.mxu0
        %v1051 = vadd.f32 %v1019, %v1035
        %v1052 = vadd.f32 %v1016, %v1048
        %s1053 = scalar_lea.vmem %s5, 8
        %v1054 = vld [vmem:[%s1053] sm:$0xf]
        %v1056 = vsel %vm978, %v1054, 0
        %1058 = vmatpush.bf16.msra.mxu0 0
        %1059 = vmatpush.bf16.msra.mxu0 0
        %1060 = vmatpush.bf16.msra.mxu0 0
        %1061 = vmatpush.bf16.msra.mxu0 0
        %1062 = vmatpush.bf16.msra.mxu0 0
        %1063 = vmatpush.bf16.msra.mxu0 %v970
        %1064 = vmatpush.bf16.msra.mxu0 %v968
        %1065 = vmatpush.bf16.msra.mxu0 %v966
        %1066 = vmatmul.bf16.gmra.mxu0 %v1056
        %v1067 = vpop.f32.mrf.mxu0
        %v1068 = vadd.f32 0.0, %v1067
        %v1069 = vpop.f32.mrf.mxu0
        %1070 = vdwg.mxu0
        %1071 = vmatpush.bf16.msra.mxu0 0
        %1072 = vmatpush.bf16.msra.mxu0 0
        %1073 = vmatpush.bf16.msra.mxu0 0
        %1074 = vmatpush.bf16.msra.mxu0 0
        %1075 = vmatpush.bf16.msra.mxu0 0
        %1076 = vmatpush.bf16.msra.mxu0 %v971
        %1077 = vmatpush.bf16.msra.mxu0 %v969
        %1078 = vmatpush.bf16.msra.mxu0 %v967
        %1079 = vmatmul.bf16.gmra.mxu0 %v1056
        %v1080 = vpop.f32.mrf.mxu0
        %v1081 = vadd.f32 0.0, %v1080
        %v1082 = vpop.f32.mrf.mxu0
        %1083 = vdwg.mxu0
        %1086 = vrot.lane.b32.xlu0 %v1068, 112
        %v1087 = vpop.permute.xlu0 %1086
        %1088 = vrot.lane.b32.xlu0 %v1081, 112
        %v1089 = vpop.permute.xlu0 %1088
        %vm1090 = vcmask 916480
        %v1091 = vsel %vm1090, %v1087, %v1089
        %v1095 = vsel %vm1090, %v1089, %v1087
        %v1096 = vadd.f32 %v1051, %v1091
        %v1097 = vadd.f32 %v1052, %v1095
        %1099 = vset.pattern.permute.xlu0 0
        %1100 = vperm.xlu0 %1099, %v940
        %v1101 = vpop.permute.xlu0 %1100
        %v1103 = vadd.f32 %v1096, %v1101
        %v1104 = vadd.f32 %v1097, %v1101
        %v1105 = vld [vmem:[%s8] sm:$0xff]
        %v1106 = vld [vmem:[%s9] sm:$0xff]
        %v1107 = vld [vmem:[%s7] sm:$0xff]
        %v1108 = vadd.f32 %v1103, %v1104
        %1109 = vadd.xlane.f32.xlu0 %v1108
        %v1110 = vpop.xlane.xlu0 %1109
        %vm1111 = vcmask 64512
        %v1113 = vsel %vm1111, %v1107, 0
        %1115 = vmatpush.msra.mxu0 0.0
        %1116 = vmatpush.msra.mxu0 0.0
        %1117 = vmatpush.msra.mxu0 0.0
        %1118 = vmatpush.msra.mxu0 0.0
        %1119 = vmatpush.msra.mxu0 0.0
        %1120 = vmatpush.msra.mxu0 0.0
        %1121 = vmatpush.msra.mxu0 0.0
        %1122 = vmatpush.msra.mxu0 0.0
        %1123 = vmatpush.msra.mxu0 0.0
        %1124 = vmatpush.msra.mxu0 0.0
        %1125 = vmatpush.msra.mxu0 0.0
        %1126 = vmatpush.msra.mxu0 0.0
        %1127 = vmatpush.msra.mxu0 0.0
        %1128 = vmatpush.msra.mxu0 0.0
        %1129 = vmatpush.msra.mxu0 0.0
        %v1130 = vand.u32 %v1110, 4294901760
        %1131 = vmatpush.msra.mxu0 %v1130
        %v1132 = vand.u32 %v1113, 4294901760
        %v1133 = vsub.f32 %v1113, %v1132
        %v1134 = vand.u32 %v1133, 4294901760
        %v1135 = vsub.f32 %v1133, %v1134
        %v1136 = vand.u32 %v1135, 4294901760
        %1137 = vmatmul.f32.gmra.mxu0 %v1136
        %v1138 = vpop.f32.mrf.mxu0
        %v1139 = vadd.f32 0.0, %v1138
        %1140 = vdwg.mxu0
        %1141 = vmatpush.msra.mxu0 0.0
        %1142 = vmatpush.msra.mxu0 0.0
        %1143 = vmatpush.msra.mxu0 0.0
        %1144 = vmatpush.msra.mxu0 0.0
        %1145 = vmatpush.msra.mxu0 0.0
        %1146 = vmatpush.msra.mxu0 0.0
        %1147 = vmatpush.msra.mxu0 0.0
        %1148 = vmatpush.msra.mxu0 0.0
        %1149 = vmatpush.msra.mxu0 0.0
        %1150 = vmatpush.msra.mxu0 0.0
        %1151 = vmatpush.msra.mxu0 0.0
        %1152 = vmatpush.msra.mxu0 0.0
        %1153 = vmatpush.msra.mxu0 0.0
        %1154 = vmatpush.msra.mxu0 0.0
        %1155 = vmatpush.msra.mxu0 0.0
        %v1156 = vand.u32 %v1110, 4294901760
        %v1157 = vsub.f32 %v1110, %v1156
        %v1158 = vand.u32 %v1157, 4294901760
        %v1159 = vsub.f32 %v1157, %v1158
        %v1160 = vand.u32 %v1159, 4294901760
        %1161 = vmatpush.msra.mxu0 %v1160
        %v1162 = vand.u32 %v1113, 4294901760
        %1163 = vmatmul.f32.gmra.mxu0 %v1162
        %v1164 = vpop.f32.mrf.mxu0
        %v1165 = vadd.f32 %v1139, %v1164
        %1166 = vdwg.mxu0
        %1167 = vmatpush.msra.mxu0 0.0
        %1168 = vmatpush.msra.mxu0 0.0
        %1169 = vmatpush.msra.mxu0 0.0
        %1170 = vmatpush.msra.mxu0 0.0
        %1171 = vmatpush.msra.mxu0 0.0
        %1172 = vmatpush.msra.mxu0 0.0
        %1173 = vmatpush.msra.mxu0 0.0
        %1174 = vmatpush.msra.mxu0 0.0
        %1175 = vmatpush.msra.mxu0 0.0
        %1176 = vmatpush.msra.mxu0 0.0
        %1177 = vmatpush.msra.mxu0 0.0
        %1178 = vmatpush.msra.mxu0 0.0
        %1179 = vmatpush.msra.mxu0 0.0
        %1180 = vmatpush.msra.mxu0 0.0
        %1181 = vmatpush.msra.mxu0 0.0
        %v1182 = vand.u32 %v1110, 4294901760
        %v1183 = vsub.f32 %v1110, %v1182
        %1184 = vmatpush.msra.mxu0 %v1183
        %v1185 = vand.u32 %v1113, 4294901760
        %v1186 = vsub.f32 %v1113, %v1185
        %1187 = vmatmul.f32.gmra.mxu0 %v1186
        %v1188 = vpop.f32.mrf.mxu0
        %v1189 = vadd.f32 %v1165, %v1188
        %1190 = vdwg.mxu0
        %1191 = vmatpush.msra.mxu0 0.0
        %1192 = vmatpush.msra.mxu0 0.0
        %1193 = vmatpush.msra.mxu0 0.0
        %1194 = vmatpush.msra.mxu0 0.0
        %1195 = vmatpush.msra.mxu0 0.0
        %1196 = vmatpush.msra.mxu0 0.0
        %1197 = vmatpush.msra.mxu0 0.0
        %1198 = vmatpush.msra.mxu0 0.0
        %1199 = vmatpush.msra.mxu0 0.0
        %1200 = vmatpush.msra.mxu0 0.0
        %1201 = vmatpush.msra.mxu0 0.0
        %1202 = vmatpush.msra.mxu0 0.0
        %1203 = vmatpush.msra.mxu0 0.0
        %1204 = vmatpush.msra.mxu0 0.0
        %1205 = vmatpush.msra.mxu0 0.0
        %v1206 = vand.u32 %v1110, 4294901760
        %1207 = vmatpush.msra.mxu0 %v1206
        %v1208 = vand.u32 %v1113, 4294901760
        %v1209 = vsub.f32 %v1113, %v1208
        %v1210 = vand.u32 %v1209, 4294901760
        %1211 = vmatmul.f32.gmra.mxu0 %v1210
        %v1212 = vpop.f32.mrf.mxu0
        %v1213 = vadd.f32 %v1189, %v1212
        %1214 = vdwg.mxu0
        %1215 = vmatpush.msra.mxu0 0.0
        %1216 = vmatpush.msra.mxu0 0.0
        %1217 = vmatpush.msra.mxu0 0.0
        %1218 = vmatpush.msra.mxu0 0.0
        %1219 = vmatpush.msra.mxu0 0.0
        %1220 = vmatpush.msra.mxu0 0.0
        %1221 = vmatpush.msra.mxu0 0.0
        %1222 = vmatpush.msra.mxu0 0.0
        %1223 = vmatpush.msra.mxu0 0.0
        %1224 = vmatpush.msra.mxu0 0.0
        %1225 = vmatpush.msra.mxu0 0.0
        %1226 = vmatpush.msra.mxu0 0.0
        %1227 = vmatpush.msra.mxu0 0.0
        %1228 = vmatpush.msra.mxu0 0.0
        %1229 = vmatpush.msra.mxu0 0.0
        %v1230 = vand.u32 %v1110, 4294901760
        %v1231 = vsub.f32 %v1110, %v1230
        %v1232 = vand.u32 %v1231, 4294901760
        %1233 = vmatpush.msra.mxu0 %v1232
        %v1234 = vand.u32 %v1113, 4294901760
        %1235 = vmatmul.f32.gmra.mxu0 %v1234
        %v1236 = vpop.f32.mrf.mxu0
        %v1237 = vadd.f32 %v1213, %v1236
        %1238 = vdwg.mxu0
        %1239 = vmatpush.msra.mxu0 0.0
        %1240 = vmatpush.msra.mxu0 0.0
        %1241 = vmatpush.msra.mxu0 0.0
        %1242 = vmatpush.msra.mxu0 0.0
        %1243 = vmatpush.msra.mxu0 0.0
        %1244 = vmatpush.msra.mxu0 0.0
        %1245 = vmatpush.msra.mxu0 0.0
        %1246 = vmatpush.msra.mxu0 0.0
        %1247 = vmatpush.msra.mxu0 0.0
        %1248 = vmatpush.msra.mxu0 0.0
        %1249 = vmatpush.msra.mxu0 0.0
        %1250 = vmatpush.msra.mxu0 0.0
        %1251 = vmatpush.msra.mxu0 0.0
        %1252 = vmatpush.msra.mxu0 0.0
        %1253 = vmatpush.msra.mxu0 0.0
        %v1254 = vand.u32 %v1110, 4294901760
        %1255 = vmatpush.msra.mxu0 %v1254
        %v1256 = vand.u32 %v1113, 4294901760
        %1257 = vmatmul.f32.gmra.mxu0 %v1256
        %v1258 = vpop.f32.mrf.mxu0
        %v1259 = vadd.f32 %v1237, %v1258
        %1260 = vdwg.mxu0
        %1262 = vset.pattern.permute.xlu0 0
        %1263 = vperm.xlu0 %1262, %v1259
        %v1264 = vpop.permute.xlu0 %1263
        %v1266 = vsub.f32 %v1103, %v1264
        %v1267 = vsub.f32 %v1104, %v1264
        %v1268 = vmul.f32 %v1266, %v1266
        %v1269 = vmul.f32 %v1267, %v1267
        %v1270 = vadd.f32 %v1268, %v1269
        %1271 = vadd.xlane.f32.xlu0 %v1270
        %v1272 = vpop.xlane.xlu0 %1271
        %1273 = vmatpush.msra.mxu0 0.0
        %1274 = vmatpush.msra.mxu0 0.0
        %1275 = vmatpush.msra.mxu0 0.0
        %1276 = vmatpush.msra.mxu0 0.0
        %1277 = vmatpush.msra.mxu0 0.0
        %1278 = vmatpush.msra.mxu0 0.0
        %1279 = vmatpush.msra.mxu0 0.0
        %1280 = vmatpush.msra.mxu0 0.0
        %1281 = vmatpush.msra.mxu0 0.0
        %1282 = vmatpush.msra.mxu0 0.0
        %1283 = vmatpush.msra.mxu0 0.0
        %1284 = vmatpush.msra.mxu0 0.0
        %1285 = vmatpush.msra.mxu0 0.0
        %1286 = vmatpush.msra.mxu0 0.0
        %1287 = vmatpush.msra.mxu0 0.0
        %v1288 = vand.u32 %v1272, 4294901760
        %1289 = vmatpush.msra.mxu0 %v1288
        %v1290 = vand.u32 %v1113, 4294901760
        %v1291 = vsub.f32 %v1113, %v1290
        %v1292 = vand.u32 %v1291, 4294901760
        %v1293 = vsub.f32 %v1291, %v1292
        %v1294 = vand.u32 %v1293, 4294901760
        %1295 = vmatmul.f32.gmra.mxu0 %v1294
        %v1296 = vpop.f32.mrf.mxu0
        %v1297 = vadd.f32 1e-05, %v1296
        %1298 = vdwg.mxu0
        %1299 = vmatpush.msra.mxu0 0.0
        %1300 = vmatpush.msra.mxu0 0.0
        %1301 = vmatpush.msra.mxu0 0.0
        %1302 = vmatpush.msra.mxu0 0.0
        %1303 = vmatpush.msra.mxu0 0.0
        %1304 = vmatpush.msra.mxu0 0.0
        %1305 = vmatpush.msra.mxu0 0.0
        %1306 = vmatpush.msra.mxu0 0.0
        %1307 = vmatpush.msra.mxu0 0.0
        %1308 = vmatpush.msra.mxu0 0.0
        %1309 = vmatpush.msra.mxu0 0.0
        %1310 = vmatpush.msra.mxu0 0.0
        %1311 = vmatpush.msra.mxu0 0.0
        %1312 = vmatpush.msra.mxu0 0.0
        %1313 = vmatpush.msra.mxu0 0.0
        %v1314 = vand.u32 %v1272, 4294901760
        %v1315 = vsub.f32 %v1272, %v1314
        %v1316 = vand.u32 %v1315, 4294901760
        %v1317 = vsub.f32 %v1315, %v1316
        %v1318 = vand.u32 %v1317, 4294901760
        %1319 = vmatpush.msra.mxu0 %v1318
        %v1320 = vand.u32 %v1113, 4294901760
        %1321 = vmatmul.f32.gmra.mxu0 %v1320
        %v1322 = vpop.f32.mrf.mxu0
        %v1323 = vadd.f32 %v1297, %v1322
        %1324 = vdwg.mxu0
        %1325 = vmatpush.msra.mxu0 0.0
        %1326 = vmatpush.msra.mxu0 0.0
        %1327 = vmatpush.msra.mxu0 0.0
        %1328 = vmatpush.msra.mxu0 0.0
        %1329 = vmatpush.msra.mxu0 0.0
        %1330 = vmatpush.msra.mxu0 0.0
        %1331 = vmatpush.msra.mxu0 0.0
        %1332 = vmatpush.msra.mxu0 0.0
        %1333 = vmatpush.msra.mxu0 0.0
        %1334 = vmatpush.msra.mxu0 0.0
        %1335 = vmatpush.msra.mxu0 0.0
        %1336 = vmatpush.msra.mxu0 0.0
        %1337 = vmatpush.msra.mxu0 0.0
        %1338 = vmatpush.msra.mxu0 0.0
        %1339 = vmatpush.msra.mxu0 0.0
        %v1340 = vand.u32 %v1272, 4294901760
        %v1341 = vsub.f32 %v1272, %v1340
        %1342 = vmatpush.msra.mxu0 %v1341
        %v1343 = vand.u32 %v1113, 4294901760
        %v1344 = vsub.f32 %v1113, %v1343
        %1345 = vmatmul.f32.gmra.mxu0 %v1344
        %v1346 = vpop.f32.mrf.mxu0
        %v1347 = vadd.f32 %v1323, %v1346
        %1348 = vdwg.mxu0
        %1349 = vmatpush.msra.mxu0 0.0
        %1350 = vmatpush.msra.mxu0 0.0
        %1351 = vmatpush.msra.mxu0 0.0
        %1352 = vmatpush.msra.mxu0 0.0
        %1353 = vmatpush.msra.mxu0 0.0
        %1354 = vmatpush.msra.mxu0 0.0
        %1355 = vmatpush.msra.mxu0 0.0
        %1356 = vmatpush.msra.mxu0 0.0
        %1357 = vmatpush.msra.mxu0 0.0
        %1358 = vmatpush.msra.mxu0 0.0
        %1359 = vmatpush.msra.mxu0 0.0
        %1360 = vmatpush.msra.mxu0 0.0
        %1361 = vmatpush.msra.mxu0 0.0
        %1362 = vmatpush.msra.mxu0 0.0
        %1363 = vmatpush.msra.mxu0 0.0
        %v1364 = vand.u32 %v1272, 4294901760
        %1365 = vmatpush.msra.mxu0 %v1364
        %v1366 = vand.u32 %v1113, 4294901760
        %v1367 = vsub.f32 %v1113, %v1366
        %v1368 = vand.u32 %v1367, 4294901760
        %1369 = vmatmul.f32.gmra.mxu0 %v1368
        %v1370 = vpop.f32.mrf.mxu0
        %v1371 = vadd.f32 %v1347, %v1370
        %1372 = vdwg.mxu0
        %1373 = vmatpush.msra.mxu0 0.0
        %1374 = vmatpush.msra.mxu0 0.0
        %1375 = vmatpush.msra.mxu0 0.0
        %1376 = vmatpush.msra.mxu0 0.0
        %1377 = vmatpush.msra.mxu0 0.0
        %1378 = vmatpush.msra.mxu0 0.0
        %1379 = vmatpush.msra.mxu0 0.0
        %1380 = vmatpush.msra.mxu0 0.0
        %1381 = vmatpush.msra.mxu0 0.0
        %1382 = vmatpush.msra.mxu0 0.0
        %1383 = vmatpush.msra.mxu0 0.0
        %1384 = vmatpush.msra.mxu0 0.0
        %1385 = vmatpush.msra.mxu0 0.0
        %1386 = vmatpush.msra.mxu0 0.0
        %1387 = vmatpush.msra.mxu0 0.0
        %v1388 = vand.u32 %v1272, 4294901760
        %v1389 = vsub.f32 %v1272, %v1388
        %v1390 = vand.u32 %v1389, 4294901760
        %1391 = vmatpush.msra.mxu0 %v1390
        %v1392 = vand.u32 %v1113, 4294901760
        %1393 = vmatmul.f32.gmra.mxu0 %v1392
        %v1394 = vpop.f32.mrf.mxu0
        %v1395 = vadd.f32 %v1371, %v1394
        %1396 = vdwg.mxu0
        %1397 = vmatpush.msra.mxu0 0.0
        %1398 = vmatpush.msra.mxu0 0.0
        %1399 = vmatpush.msra.mxu0 0.0
        %1400 = vmatpush.msra.mxu0 0.0
        %1401 = vmatpush.msra.mxu0 0.0
        %1402 = vmatpush.msra.mxu0 0.0
        %1403 = vmatpush.msra.mxu0 0.0
        %1404 = vmatpush.msra.mxu0 0.0
        %1405 = vmatpush.msra.mxu0 0.0
        %1406 = vmatpush.msra.mxu0 0.0
        %1407 = vmatpush.msra.mxu0 0.0
        %1408 = vmatpush.msra.mxu0 0.0
        %1409 = vmatpush.msra.mxu0 0.0
        %1410 = vmatpush.msra.mxu0 0.0
        %1411 = vmatpush.msra.mxu0 0.0
        %v1412 = vand.u32 %v1272, 4294901760
        %1413 = vmatpush.msra.mxu0 %v1412
        %v1414 = vand.u32 %v1113, 4294901760
        %1415 = vmatmul.f32.gmra.mxu0 %v1414
        %v1416 = vpop.f32.mrf.mxu0
        %v1417 = vadd.f32 %v1395, %v1416
        %1418 = vdwg.mxu0
        %v1419 = vrsqrt.pop %v1417
        %v1420 = vmul.f32 %v1419, %v1417
        %v1421 = vmul.f32 %v1420, %v1419
        %v1422 = vmul.f32 0.5, %v1421
        %v1423 = vsub.f32 1.5, %v1422
        %v1424 = vmul.f32 %v1419, %v1423
        %vm1425 = vweird.f32 %v1417
        %vm1426 = vweird.f32 %v1419
        %vm1427 = vmor %vm1425, %vm1426
        %v1428 = vsel %vm1427, %v1419, %v1424
        %1430 = vset.pattern.permute.xlu0 0
        %1431 = vperm.xlu0 %1430, %v1428
        %v1432 = vpop.permute.xlu0 %1431
        %v1434 = vmul.f32 %v1266, %v1432
        %v1435 = vmul.f32 %v1267, %v1432
        %1437 = vset.pattern.permute.xlu0 0
        %1438 = vperm.xlu0 %1437, %v1105
        %v1439 = vpop.permute.xlu0 %1438
        %v1441 = vmul.f32 %v1434, %v1439
        %v1442 = vmul.f32 %v1435, %v1439
        %1444 = vset.pattern.permute.xlu0 0
        %1445 = vperm.xlu0 %1444, %v1106
        %v1446 = vpop.permute.xlu0 %1445
        %v1448 = vadd.f32 %v1441, %v1446
        %v1449 = vadd.f32 %v1442, %v1446
        %v1450 = vld [vmem:[%s431] sm:$0xff]
        %v1451 = vld [vmem:[%s431 + $0x8] sm:$0xff]
        %1453 = vset.pattern.permute.xlu0 0
        %1454 = vperm.xlu0 %1453, %v1450
        %v1455 = vpop.permute.xlu0 %1454
        %v1457 = vmul.f32 %v1448, %v1455
        %v1458 = vmul.f32 %v1449, %v1455
        %1460 = vset.pattern.permute.xlu0 0
        %1461 = vperm.xlu0 %1460, %v1451
        %v1462 = vpop.permute.xlu0 %1461
        %v1464 = vadd.f32 %v1457, %v1462
        %v1465 = vadd.f32 %v1458, %v1462
        %v1466 = vxor.u32 %v1464, 2147483648
        %v1467 = vxor.u32 %v1465, 2147483648
        %v1468 = vmul.f32 %v1466, 1.442695
        %v1469 = vpow.pop %v1468
        %v1470 = vmul.f32 %v1467, 1.442695
        %v1471 = vpow.pop %v1470
        %v1472 = vadd.f32 %v1469, 1.0
        %v1473 = vadd.f32 %v1471, 1.0
        %v1474 = vrcp.pop %v1472
        %v1475 = vmul.f32 %v1472, %v1474
        %v1476 = vsub.f32 1.0, %v1475
        %v1477 = vmul.f32 %v1474, %v1476
        %v1478 = vadd.f32 %v1474, %v1477
        %vm1479 = vweird.f32 %v1472
        %vm1480 = vweird.f32 %v1474
        %vm1481 = vmor %vm1479, %vm1480
        %v1482 = vsel %vm1481, %v1474, %v1478
        %v1483 = vand.u32 2147483647, %v1472
        %vm1484 = vcmp.eq.f32.partialorder %v1483, 8.507059e+37
        %v1485 = vand.u32 %v1472, 2147483648
        %v1486 = vor.u32 1.1754944e-38, %v1485
        %v1487 = vsel %vm1484, %v1486, %v1482
        %v1488 = vmul.f32 1.0, %v1487
        %v1489 = vrcp.pop %v1473
        %v1490 = vmul.f32 %v1473, %v1489
        %v1491 = vsub.f32 1.0, %v1490
        %v1492 = vmul.f32 %v1489, %v1491
        %v1493 = vadd.f32 %v1489, %v1492
        %vm1494 = vweird.f32 %v1473
        %vm1495 = vweird.f32 %v1489
        %vm1496 = vmor %vm1494, %vm1495
        %v1497 = vsel %vm1496, %v1489, %v1493
        %v1498 = vand.u32 2147483647, %v1473
        %vm1499 = vcmp.eq.f32.partialorder %v1498, 8.507059e+37
        %v1500 = vand.u32 %v1473, 2147483648
        %v1501 = vor.u32 1.1754944e-38, %v1500
        %v1502 = vsel %vm1499, %v1501, %v1497
        %v1503 = vmul.f32 1.0, %v1502
        %v1504 = vmul.f32 %v1464, %v1488
        %v1505 = vmul.f32 %v1465, %v1503
        %1508 = vrot.lane.b32.xlu0 %v1504, 113
        %v1509 = vpop.permute.xlu0 %1508
        %1510 = vrot.lane.b32.xlu0 %v1505, 113
        %v1511 = vpop.permute.xlu0 %1510
        %v1512 = vsel %vm850, %v1509, %v1511
        %v1516 = vsel %vm850, %v1511, %v1509
        %1517 = vrot.lane.b32.xlu0 %v1505, 1
        %v1518 = vpop.permute.xlu0 %1517
        %1520 = vrot.lane.b32.xlu0 %v1504, 1
        %v1521 = vpop.permute.xlu0 %1520
        %v1522 = vsel %vm872, %v1521, %v1518
        %v1525 = vsel %vm872, %v1518, %v1521
        %v1526 = vsel %vm879, %v1512, %v1525
        %v1527 = vsel %vm880, %v1516, %v1522
        %1528 = vrot.lane.b32.xlu0 %v1505, 15
        %v1529 = vpop.permute.xlu0 %1528
        %1531 = vrot.lane.b32.xlu0 %v1504, 15
        %v1532 = vpop.permute.xlu0 %1531
        %v1533 = vsel %vm895, %v1532, %v1529
        %v1536 = vsel %vm895, %v1529, %v1532
        %1537 = vrot.lane.b32.xlu0 %v1504, 127
        %v1538 = vpop.permute.xlu0 %1537
        %1539 = vrot.lane.b32.xlu0 %v1505, 127
        %v1540 = vpop.permute.xlu0 %1539
        %v1541 = vsel %vm907, %v1538, %v1540
        %v1545 = vsel %vm907, %v1540, %v1538
        %v1546 = vsel %vm919, %v1536, %v1541
        %v1547 = vsel %vm920, %v1533, %v1545
        %v1548 = vpack.c.bf16 %v1527, %v1526
        %1549 = vst [vmem:[#allocation2] sm:$0xff] %v1548
        %1550 = vst [vmem:[#allocation2 + $0x8] sm:$0xff] 0
        %v1551 = vpack.c.bf16 %v1505, %v1504
        %1552 = vst [vmem:[#allocation2 + $0x10] sm:$0xff] %v1551
        %1553 = vst [vmem:[#allocation2 + $0x18] sm:$0xff] 0
        %v1554 = vpack.c.bf16 %v1547, %v1546
        %1555 = vst [vmem:[#allocation2 + $0x20] sm:$0xff] %v1554
        %1556 = vst [vmem:[#allocation2 + $0x28] sm:$0xff] 0
        %1557 = vst [vmem:[#allocation1] ss:$2 sm:$0xff] %v442
        %v1558 = vld.sshfl [vmem:[#allocation1] sm:$0xff pattern:$0x75316420]
        %v1559 = vld.sshfl [vmem:[#allocation1 + $0x8] sm:$0xff pattern:$0x75316420]
        %v1562 = vpack.c.bf16 %v1559, %v1558
        %1563 = vst [vmem:[#allocation2 + $0x30] sm:$0x33] %v1562
        %1564 = vst [vmem:[#allocation2 + $0x30] sm:$0xcc] 0
        %1565 = vst [vmem:[#allocation2 + $0x38] sm:$0xff] 0
        %v1566 = vld [vmem:[%s11] sm:$0xff]
        %v1567 = vld [vmem:[#allocation2] sm:$0xff]
        %v1568 = vld [vmem:[#allocation2 + $0x8] sm:$0xff]
        %v1569 = vld [vmem:[#allocation2 + $0x10] sm:$0xff]
        %v1570 = vld [vmem:[#allocation2 + $0x18] sm:$0xff]
        %v1571 = vld [vmem:[#allocation2 + $0x20] sm:$0xff]
        %v1572 = vld [vmem:[#allocation2 + $0x28] sm:$0xff]
        %v1573 = vld [vmem:[#allocation2 + $0x30] sm:$0xff]
        %v1574 = vld [vmem:[#allocation2 + $0x38] sm:$0xff]
        %v1575 = vld [vmem:[%s10] sm:$0xf]
        %v1584 = vunpack.c.l.b16 %v1567
        %v1585 = vunpack.c.h.b16 %v1567
        %v1586 = vunpack.c.l.b16 %v1568
        %v1587 = vunpack.c.h.b16 %v1568
        %v1588 = vunpack.c.l.b16 %v1569
        %v1589 = vunpack.c.h.b16 %v1569
        %v1590 = vunpack.c.l.b16 %v1570
        %v1591 = vunpack.c.h.b16 %v1570
        %v1592 = vunpack.c.l.b16 %v1571
        %v1593 = vunpack.c.h.b16 %v1571
        %v1594 = vunpack.c.l.b16 %v1572
        %v1595 = vunpack.c.h.b16 %v1572
        %v1596 = vunpack.c.l.b16 %v1573
        %v1597 = vunpack.c.h.b16 %v1573
        %v1598 = vunpack.c.l.b16 %v1574
        %v1599 = vunpack.c.h.b16 %v1574
        %v1600 = vpack.c.b16 %v1586, %v1584
        %v1601 = vpack.c.b16 %v1587, %v1585
        %v1602 = vpack.c.b16 %v1590, %v1588
        %v1603 = vpack.c.b16 %v1591, %v1589
        %v1604 = vpack.c.b16 %v1594, %v1592
        %v1605 = vpack.c.b16 %v1595, %v1593
        %v1606 = vpack.c.b16 %v1598, %v1596
        %v1607 = vpack.c.b16 %v1599, %v1597
        %vm1616 = vcmask 523264
        %v1618 = vsel %vm1616, %v1575, 0
        %1620 = vmatpush.bf16.msra.mxu0 0
        %1621 = vmatpush.bf16.msra.mxu0 0
        %1622 = vmatpush.bf16.msra.mxu0 0
        %1623 = vmatpush.bf16.msra.mxu0 0
        %1624 = vmatpush.bf16.msra.mxu0 %v1606
        %1625 = vmatpush.bf16.msra.mxu0 %v1604
        %1626 = vmatpush.bf16.msra.mxu0 %v1602
        %1627 = vmatpush.bf16.msra.mxu0 %v1600
        %1628 = vmatmul.bf16.gmra.mxu0 %v1618
        %v1629 = vpop.f32.mrf.mxu0
        %v1630 = vadd.f32 0.0, %v1629
        %v1631 = vpop.f32.mrf.mxu0
        %1632 = vdwg.mxu0
        %1633 = vmatpush.bf16.msra.mxu0 0
        %1634 = vmatpush.bf16.msra.mxu0 0
        %1635 = vmatpush.bf16.msra.mxu0 0
        %1636 = vmatpush.bf16.msra.mxu0 0
        %1637 = vmatpush.bf16.msra.mxu0 %v1607
        %1638 = vmatpush.bf16.msra.mxu0 %v1605
        %1639 = vmatpush.bf16.msra.mxu0 %v1603
        %1640 = vmatpush.bf16.msra.mxu0 %v1601
        %1641 = vmatmul.bf16.gmra.mxu0 %v1618
        %v1642 = vpop.f32.mrf.mxu0
        %v1643 = vadd.f32 0.0, %v1642
        %v1644 = vpop.f32.mrf.mxu0
        %1645 = vdwg.mxu0
        %1647 = vrot.lane.b32.xlu0 %v1643, 16
        %v1648 = vpop.permute.xlu0 %1647
        %1651 = vrot.lane.b32.xlu0 %v1630, 16
        %v1652 = vpop.permute.xlu0 %1651
        %v1653 = vsel %vm1015, %v1652, %v1648
        %v1656 = vsel %vm1015, %v1648, %v1652
        %s1657 = scalar_lea.vmem %s10, 4
        %v1658 = vld [vmem:[%s1657] sm:$0xf]
        %v1660 = vsel %vm1616, %v1658, 0
        %1662 = vmatpush.bf16.msra.mxu0 0
        %1663 = vmatpush.bf16.msra.mxu0 0
        %1664 = vmatpush.bf16.msra.mxu0 0
        %1665 = vmatpush.bf16.msra.mxu0 0
        %1666 = vmatpush.bf16.msra.mxu0 %v1606
        %1667 = vmatpush.bf16.msra.mxu0 %v1604
        %1668 = vmatpush.bf16.msra.mxu0 %v1602
        %1669 = vmatpush.bf16.msra.mxu0 %v1600
        %1670 = vmatmul.bf16.gmra.mxu0 %v1660
        %v1671 = vpop.f32.mrf.mxu0
        %v1672 = vadd.f32 0.0, %v1671
        %v1673 = vpop.f32.mrf.mxu0
        %1674 = vdwg.mxu0
        %1675 = vmatpush.bf16.msra.mxu0 0
        %1676 = vmatpush.bf16.msra.mxu0 0
        %1677 = vmatpush.bf16.msra.mxu0 0
        %1678 = vmatpush.bf16.msra.mxu0 0
        %1679 = vmatpush.bf16.msra.mxu0 %v1607
        %1680 = vmatpush.bf16.msra.mxu0 %v1605
        %1681 = vmatpush.bf16.msra.mxu0 %v1603
        %1682 = vmatpush.bf16.msra.mxu0 %v1601
        %1683 = vmatmul.bf16.gmra.mxu0 %v1660
        %v1684 = vpop.f32.mrf.mxu0
        %v1685 = vadd.f32 0.0, %v1684
        %v1686 = vpop.f32.mrf.mxu0
        %1687 = vdwg.mxu0
        %v1688 = vadd.f32 %v1656, %v1672
        %v1689 = vadd.f32 %v1653, %v1685
        %s1690 = scalar_lea.vmem %s10, 8
        %v1691 = vld [vmem:[%s1690] sm:$0xf]
        %v1693 = vsel %vm1616, %v1691, 0
        %1695 = vmatpush.bf16.msra.mxu0 0
        %1696 = vmatpush.bf16.msra.mxu0 0
        %1697 = vmatpush.bf16.msra.mxu0 0
        %1698 = vmatpush.bf16.msra.mxu0 0
        %1699 = vmatpush.bf16.msra.mxu0 %v1606
        %1700 = vmatpush.bf16.msra.mxu0 %v1604
        %1701 = vmatpush.bf16.msra.mxu0 %v1602
        %1702 = vmatpush.bf16.msra.mxu0 %v1600
        %1703 = vmatmul.bf16.gmra.mxu0 %v1693
        %v1704 = vpop.f32.mrf.mxu0
        %v1705 = vadd.f32 0.0, %v1704
        %v1706 = vpop.f32.mrf.mxu0
        %1707 = vdwg.mxu0
        %1708 = vmatpush.bf16.msra.mxu0 0
        %1709 = vmatpush.bf16.msra.mxu0 0
        %1710 = vmatpush.bf16.msra.mxu0 0
        %1711 = vmatpush.bf16.msra.mxu0 0
        %1712 = vmatpush.bf16.msra.mxu0 %v1607
        %1713 = vmatpush.bf16.msra.mxu0 %v1605
        %1714 = vmatpush.bf16.msra.mxu0 %v1603
        %1715 = vmatpush.bf16.msra.mxu0 %v1601
        %1716 = vmatmul.bf16.gmra.mxu0 %v1693
        %v1717 = vpop.f32.mrf.mxu0
        %v1718 = vadd.f32 0.0, %v1717
        %v1719 = vpop.f32.mrf.mxu0
        %1720 = vdwg.mxu0
        %1723 = vrot.lane.b32.xlu0 %v1705, 112
        %v1724 = vpop.permute.xlu0 %1723
        %1725 = vrot.lane.b32.xlu0 %v1718, 112
        %v1726 = vpop.permute.xlu0 %1725
        %v1727 = vsel %vm1090, %v1724, %v1726
        %v1731 = vsel %vm1090, %v1726, %v1724
        %v1732 = vadd.f32 %v1688, %v1727
        %v1733 = vadd.f32 %v1689, %v1731
        %1735 = vset.pattern.permute.xlu0 0
        %1736 = vperm.xlu0 %1735, %v1566
        %v1737 = vpop.permute.xlu0 %1736
        %v1739 = vadd.f32 %v1732, %v1737
        %v1740 = vadd.f32 %v1733, %v1737
        %1741 = vst [vmem:[%s421] sm:$0xff] %v1739
        %1742 = vst [vmem:[%s421 + $0x8] sm:$0xff] %v1740
        %s1743 = sand.u32 %s296, 1
        %s1744 = scalar_lea.sflag [#allocation4], %s1743
        %s1745 = sand.u32 %s296, 1
        %s1746 = smul.addr %s1745, 16
        %s1747 = scalar_lea.vmem [#allocation3], %s1746
        // Predicated region
        $region69: #{tpu_custom_call.1} parent=67 // pred_check
          %p1748 = pneg %p306
        $region70: #{tpu_custom_call.1} parent=67 // pred_check_branch
          %1750 = sbr.rel (%p1748) target = $region72
        $region71: #{tpu_custom_call.1} parent=67 // pred_region
          %1752 = vsyncadd %s1744, 0
          %s1753 = smul.addr %s26, 2
          %s1754 = smul.addr %s1753, 8
          %s1755 = scalar_lea.hbm %s12, %s1754
          %s1757 = sshll.u32 %s1747, 4
          %s1758 = int_to_ptr.vmem [resolvable:$true] %s1757
          %s1759 = sshll.u32 %s1755, 4
          %s1760 = int_to_ptr.hbm [resolvable:$true] %s1759
          %1762 = dma.vmem_to_hbm [thread:$0]  %s1758, 256, %s1760, %s1744
        $region72: #{tpu_custom_call.1} parent=67 // pred_fallthru
          _
      $region68: #{tpu_custom_call.1} parent=5 // pred_fallthru
        _
      %p1763 = scmp.le.s32.totalorder 2, %s21
      // Predicated region
      $region73: #{tpu_custom_call.1} parent=5 // pred_check
        %p1764 = pneg %p1763
      $region74: #{tpu_custom_call.1} parent=5 // pred_check_branch
        %1766 = sbr.rel (%p1764) target = $region76
      $region75: #{tpu_custom_call.1} parent=5 // pred_region
        %s1767 = ssub.s32 %s21, 2
        // Predicated region
        $region77: #{tpu_custom_call.1} parent=75 // pred_check
          %p1768 = pneg %p312
        $region78: #{tpu_custom_call.1} parent=75 // pred_check_branch
          %1770 = sbr.rel (%p1768) target = $region80
        $region79: #{tpu_custom_call.1} parent=75 // pred_region
          %s1771 = sand.u32 %s297, 1
          %s1772 = scalar_lea.sflag [#allocation4], %s1771
          %s1773 = sand.u32 %s297, 1
          %s1774 = smul.addr %s1773, 16
          %s1775 = scalar_lea.vmem [#allocation3], %s1774
          %1777 = dma.done %s1772, 256
        $region80: #{tpu_custom_call.1} parent=75 // pred_fallthru
          _
      $region76: #{tpu_custom_call.1} parent=5 // pred_fallthru
        _
    $region6: #{tpu_custom_call.1} parent=1 // loop_footer
      %s25 = sadd.s32 1, %s21
    $region7: #{tpu_custom_call.1} parent=1 // loop_footer_branch
      %20 = sbr.rel target = $region3
    $region8: #{tpu_custom_call.1} parent=1 // loop_exit
      _
    %1778 = vsyncpa [#allocation4], 1
    %s1779 = scalar_lea.sflag [#allocation4], 1
    %1780 = vsyncpa %s1779, 1

</llo_original>
